<compile_context>
chip_gen: v7x
topology: tpu7x:2x2x1
jax: 0.10.0
libtpu: 0.0.40
codegen_flags: <defaults>
</compile_context>

<pallas_src>
import math

import jax
import jax.numpy as jnp
from jax.experimental import pallas as pl
from jax.experimental.pallas import tpu as pltpu  # noqa: F401  (TPU backend)

# ---------------- config (mirrors the PyTorch config fields used) -------------
B = 2            # batch
T = 8            # sequence length
C = 32           # n_embd
NH = 4           # n_head
HD = C // NH     # head dim
HID = 4 * C      # MLP hidden
EPS = 1e-5       # norm_eps
BT = B * T       # folded batch*time rows
# bias=False, dropout=0.0, is_causal=True, block_size >= T


def _erf_approx(x):
    # TODO(synk): exact erf approximated with Abramowitz&Stegun 7.1.26 (|err| < 1.5e-7)
    # because lax.erf may lack a Mosaic lowering; matches torch.nn.GELU() to ~1e-7.
    a1, a2, a3, a4, a5 = 0.254829592, -0.284496736, 1.421413741, -1.453152027, 1.061405429
    p = 0.3275911
    s = jnp.where(x < 0.0, -1.0, 1.0)
    ax = jnp.abs(x)
    t = 1.0 / (1.0 + p * ax)
    poly = ((((a5 * t + a4) * t + a3) * t + a2) * t + a1) * t
    return s * (1.0 - poly * jnp.exp(-ax * ax))


def _gelu_exact(x):
    return 0.5 * x * (1.0 + _erf_approx(x * (1.0 / math.sqrt(2.0))))


# -------------------------------- kernel --------------------------------------
def block_kernel(x_ref, wq_ref, wk_ref, wv_ref, wqs_ref, wks_ref,
                 wo_ref, wfc_ref, wproj_ref, cos_ref, sin_ref,
                 bias_ref, o_ref):
    x = x_ref[...]                                            # (BT, C) f32

    # ---- RMSNorm 1 (gain g1 is folded into wq/wk/wv/wqs/wks rows) ----
    ms = jnp.mean(x * x, axis=-1, keepdims=True)
    h = x * jax.lax.rsqrt(ms + EPS)                           # (BT, C)

    # ---- Q/K/V projections (wq / wqs pre-scaled by 1/sqrt(HD); wqs/wks have
    # the RoPE pair-swap column permutation folded in) ----
    q = jnp.dot(h, wq_ref[...], preferred_element_type=jnp.float32)    # (BT, C)
    k = jnp.dot(h, wk_ref[...], preferred_element_type=jnp.float32)
    v = jnp.dot(h, wv_ref[...], preferred_element_type=jnp.float32)
    qs = jnp.dot(h, wqs_ref[...], preferred_element_type=jnp.float32)  # pair_swap(q)
    ks = jnp.dot(h, wks_ref[...], preferred_element_type=jnp.float32)  # pair_swap(k)

    # ---- rotary embedding (interleaved pairs) ----
    # out = x * cos + pair_swap(x) * sin_signed  (tables precomputed per row).
    cosf = cos_ref[...]
    sinf = sin_ref[...]
    q = q * cosf + qs * sinf
    k = k * cosf + ks * sinf

    # ---- causal multi-head attention (batch folded: block-diagonal-causal
    # additive bias; heads handled with lane masks, full-width matmuls) ----
    bias = bias_ref[...]                                      # (BT, BT), 0 / -1e30
    lane = jax.lax.broadcasted_iota(jnp.int32, (BT, C), 1)

    y = jnp.zeros((BT, C), jnp.float32)
    for hh in range(NH):
        hmask = (lane >= hh * HD) & (lane < (hh + 1) * HD)    # this head's lanes
        qh = jnp.where(hmask, q, 0.0)                         # zero other heads
        # NT contraction on the MXU; no explicit transpose.  Score scale is
        # already folded into wq/wqs.
        sc = jax.lax.dot_general(qh, k, (((1,), (1,)), ((), ())),
                                 preferred_element_type=jnp.float32)  # (BT, BT)
        sc = sc + bias
        sc = sc - jnp.max(sc, axis=-1, keepdims=True)
        p = jnp.exp(sc)
        att = p / jnp.sum(p, axis=-1, keepdims=True)
        yh = jnp.dot(att, v, preferred_element_type=jnp.float32)      # (BT, C)
        y = y + jnp.where(hmask, yh, 0.0)                     # keep this head's lanes

    attn_out = jnp.dot(y, wo_ref[...], preferred_element_type=jnp.float32)
    x1 = x + attn_out

    # ---- RMSNorm 2 + MLP (gain g2 folded into wfc rows) ----
    ms2 = jnp.mean(x1 * x1, axis=-1, keepdims=True)
    h2 = x1 * jax.lax.rsqrt(ms2 + EPS)

    a = jnp.dot(h2, wfc_ref[...], preferred_element_type=jnp.float32)   # (BT, 4C)
    a = _gelu_exact(a)
    m = jnp.dot(a, wproj_ref[...], preferred_element_type=jnp.float32)  # (BT, C)

    o_ref[...] = x1 + m


# -------------------------------- wrapper --------------------------------------
@jax.jit
def block_forward(x, g1, wqkv, wo, g2, wfc, wproj, cos, sin):
    scale = 1.0 / math.sqrt(HD)

    # Fold RMSNorm gains into the following projection weights:
    #   (x*rsqrt*g) @ W == (x*rsqrt) @ (diag(g) @ W)
    g1c = g1.reshape(C, 1)
    g2c = g2.reshape(C, 1)
    wqkv_g = g1c * wqkv

    # split fused QKV weight into per-projection (in, out) matrices; fold the
    # attention score scale into the Q path.
    wq = wqkv_g[:, :C] * scale
    wk = wqkv_g[:, C:2 * C]
    wv = wqkv_g[:, 2 * C:]
    wfc_g = g2c * wfc

    # RoPE pair-swap (j <-> j^1) folded into the projection weights as a
    # column permutation (replaces an in-kernel permutation matmul).
    swap = jnp.arange(C) ^ 1
    wqs = wq[:, swap]
    wks = wk[:, swap]

    # interleaved per-pair rotary tables, tiled across heads and batch.
    cos_i = jnp.repeat(cos, 2, axis=-1)                       # (T, HD) [c0,c0,c1,c1,..]
    sin_i = jnp.repeat(sin, 2, axis=-1)
    sign = jnp.tile(jnp.array([-1.0, 1.0], dtype=jnp.float32), HD // 2)
    cosf = jnp.tile(jnp.tile(cos_i, (1, NH)), (B, 1)).astype(jnp.float32)           # (BT, C)
    sinf = jnp.tile(jnp.tile(sin_i * sign[None, :], (1, NH)), (B, 1)).astype(jnp.float32)

    # block-diagonal causal additive bias (batch folded into the row axis).
    r = jnp.arange(BT)
    invalid = (r[None, :] > r[:, None]) | ((r[:, None] // T) != (r[None, :] // T))
    bias = jnp.where(invalid, jnp.float32(-1e30), jnp.float32(0.0))                  # (BT, BT)

    xf = x.reshape(BT, C)

    # Single invocation, no grid: every operand is a whole-array VMEM ref
    # (total footprint ~65 KiB, far under the VMEM budget on every generation).
    out = pl.pallas_call(
        block_kernel,
        out_shape=jax.ShapeDtypeStruct((BT, C), jnp.float32),
    )(xf, wq, wk, wv, wqs, wks, wo, wfc_g, wproj, cosf, sinf, bias)

    return out.reshape(B, T, C)


# ---------------------------- pure-JAX reference --------------------------------
def block_reference(x, g1, wqkv, wo, g2, wfc, wproj, cos, sin):
    def rmsnorm(z, g):
        return z * jax.lax.rsqrt(jnp.mean(z * z, -1, keepdims=True) + EPS) * g

    def rope(t):  # t: (B, T, NH, HD)
        tr = t.reshape(B, T, NH, HD // 2, 2)
        te, to = tr[..., 0], tr[..., 1]
        c = cos[None, :, None, :]
        s = sin[None, :, None, :]
        oe = te * c - to * s
        oo = te * s + to * c
        return jnp.stack([oe, oo], axis=-1).reshape(B, T, NH, HD)

    h = rmsnorm(x, g1[0])
    qkv = h @ wqkv
    q, k, v = jnp.split(qkv, 3, axis=-1)
    q = rope(q.reshape(B, T, NH, HD))
    k = rope(k.reshape(B, T, NH, HD))
    v = v.reshape(B, T, NH, HD)
    q, k, v = (z.transpose(0, 2, 1, 3) for z in (q, k, v))
    sc = jnp.einsum('bhqd,bhkd->bhqk', q, k) / math.sqrt(HD)
    row = jnp.arange(T)[:, None]
    col = jnp.arange(T)[None, :]
    sc = jnp.where(col > row, -1e30, sc)
    att = jax.nn.softmax(sc, axis=-1)
    y = jnp.einsum('bhqk,bhkd->bhqd', att, v)
    y = y.transpose(0, 2, 1, 3).reshape(B, T, C)
    x1 = x + y @ wo
    h2 = rmsnorm(x1, g2[0])
    a = jax.nn.gelu(h2 @ wfc, approximate=False)
    return x1 + a @ wproj


# ------------------------------------ main --------------------------------------
if __name__ == "__main__":
    key = jax.random.PRNGKey(0)
    k_x, k_qkv, k_o, k_fc, k_pr, k_g1, k_g2 = jax.random.split(key, 7)

    x = jax.random.normal(k_x, (B, T, C), dtype=jnp.float32)

    # parameters (deterministic init; Linear weights stored as (in, out)).
    # Non-trivial RMSNorm gains exercise the host-side gain folding.
    g1 = 1.0 + 0.1 * jax.random.normal(k_g1, (1, C), dtype=jnp.float32)
    g2 = 1.0 + 0.1 * jax.random.normal(k_g2, (1, C), dtype=jnp.float32)
    wqkv = 0.02 * jax.random.normal(k_qkv, (C, 3 * C), dtype=jnp.float32)
    wo = 0.02 * jax.random.normal(k_o, (C, C), dtype=jnp.float32)
    wfc = 0.02 * jax.random.normal(k_fc, (C, HID), dtype=jnp.float32)
    wproj = 0.02 * jax.random.normal(k_pr, (HID, C), dtype=jnp.float32)

    # rotary tables: pos_cis[t, i] = exp(1j * t * freq_i), theta = 10000
    pos = jnp.arange(T, dtype=jnp.float32)
    freqs = 1.0 / (10000.0 ** (jnp.arange(0, HD, 2, dtype=jnp.float32) / HD))  # (HD//2,)
    ang = pos[:, None] * freqs[None, :]                                        # (T, HD//2)
    cos = jnp.cos(ang)
    sin = jnp.sin(ang)

    out = block_forward(x, g1, wqkv, wo, g2, wfc, wproj, cos, sin)
    out = jax.block_until_ready(out)

    ref = block_reference(x, g1, wqkv, wo, g2, wfc, wproj, cos, sin)
    ref = jax.block_until_ready(ref)

    err = float(jnp.max(jnp.abs(out - ref)))
    assert err < 1e-3, f"mismatch vs reference: max abs err = {err}"
    print("KERNEL_OK")
</pallas_src>

<mosaic_0001>
module attributes {stable_mosaic.version = 11 : i64} {
  func.func @block_kernel(%arg0: memref<16x32xf32, #tpu.memory_space<vmem>>, %arg1: memref<32x32xf32, #tpu.memory_space<vmem>>, %arg2: memref<32x32xf32, #tpu.memory_space<vmem>>, %arg3: memref<32x32xf32, #tpu.memory_space<vmem>>, %arg4: memref<32x32xf32, #tpu.memory_space<vmem>>, %arg5: memref<32x32xf32, #tpu.memory_space<vmem>>, %arg6: memref<32x32xf32, #tpu.memory_space<vmem>>, %arg7: memref<32x128xf32, #tpu.memory_space<vmem>>, %arg8: memref<128x32xf32, #tpu.memory_space<vmem>>, %arg9: memref<16x32xf32, #tpu.memory_space<vmem>>, %arg10: memref<16x32xf32, #tpu.memory_space<vmem>>, %arg11: memref<16x16xf32, #tpu.memory_space<vmem>>, %arg12: memref<16x32xf32, #tpu.memory_space<vmem>>) attributes {dimension_semantics = [], scalar_prefetch = 0 : i64, scratch_operands = 0 : i64, tpu.core_type = #tpu.core_type<tc>} {
    %c0 = arith.constant 0 : index
    %c0_0 = arith.constant 0 : index
    %0 = vector.load %arg0[%c0, %c0_0] : memref<16x32xf32, #tpu.memory_space<vmem>>, vector<16x32xf32>
    %1 = arith.mulf %0, %0 : vector<16x32xf32>
    %cst = arith.constant dense<0.000000e+00> : vector<16xf32>
    %2 = vector.multi_reduction <add>, %1, %cst [1] : vector<16x32xf32> to vector<16xf32>
    %3 = vector.shape_cast %2 : vector<16xf32> to vector<16x1xf32>
    %cst_1 = arith.constant 3.200000e+01 : f32
    %4 = vector.broadcast %cst_1 : f32 to vector<16x1xf32>
    %5 = arith.divf %3, %4 : vector<16x1xf32>
    %cst_2 = arith.constant 9.99999974E-6 : f32
    %6 = vector.broadcast %cst_2 : f32 to vector<16x1xf32>
    %7 = arith.addf %5, %6 : vector<16x1xf32>
    %8 = math.rsqrt %7 : vector<16x1xf32>
    %9 = vector.broadcast %8 : vector<16x1xf32> to vector<16x32xf32>
    %10 = arith.mulf %0, %9 : vector<16x32xf32>
    %c0_3 = arith.constant 0 : index
    %c0_4 = arith.constant 0 : index
    %11 = vector.load %arg1[%c0_3, %c0_4] : memref<32x32xf32, #tpu.memory_space<vmem>>, vector<32x32xf32>
    %cst_5 = arith.constant dense<0.000000e+00> : vector<16x32xf32>
    %12 = tpu.matmul %10, %11, %cst_5 {dimension_numbers = #tpu.dot_dimension_numbers<[1], [0], [0], [1], [0, 0, 1, 1], [], []>} : vector<16x32xf32>, vector<32x32xf32>, vector<16x32xf32> -> vector<16x32xf32>
    %c0_6 = arith.constant 0 : index
    %c0_7 = arith.constant 0 : index
    %13 = vector.load %arg2[%c0_6, %c0_7] : memref<32x32xf32, #tpu.memory_space<vmem>>, vector<32x32xf32>
    %cst_8 = arith.constant dense<0.000000e+00> : vector<16x32xf32>
    %14 = tpu.matmul %10, %13, %cst_8 {dimension_numbers = #tpu.dot_dimension_numbers<[1], [0], [0], [1], [0, 0, 1, 1], [], []>} : vector<16x32xf32>, vector<32x32xf32>, vector<16x32xf32> -> vector<16x32xf32>
    %c0_9 = arith.constant 0 : index
    %c0_10 = arith.constant 0 : index
    %15 = vector.load %arg3[%c0_9, %c0_10] : memref<32x32xf32, #tpu.memory_space<vmem>>, vector<32x32xf32>
    %cst_11 = arith.constant dense<0.000000e+00> : vector<16x32xf32>
    %16 = tpu.matmul %10, %15, %cst_11 {dimension_numbers = #tpu.dot_dimension_numbers<[1], [0], [0], [1], [0, 0, 1, 1], [], []>} : vector<16x32xf32>, vector<32x32xf32>, vector<16x32xf32> -> vector<16x32xf32>
    %c0_12 = arith.constant 0 : index
    %c0_13 = arith.constant 0 : index
    %17 = vector.load %arg4[%c0_12, %c0_13] : memref<32x32xf32, #tpu.memory_space<vmem>>, vector<32x32xf32>
    %cst_14 = arith.constant dense<0.000000e+00> : vector<16x32xf32>
    %18 = tpu.matmul %10, %17, %cst_14 {dimension_numbers = #tpu.dot_dimension_numbers<[1], [0], [0], [1], [0, 0, 1, 1], [], []>} : vector<16x32xf32>, vector<32x32xf32>, vector<16x32xf32> -> vector<16x32xf32>
    %c0_15 = arith.constant 0 : index
    %c0_16 = arith.constant 0 : index
    %19 = vector.load %arg5[%c0_15, %c0_16] : memref<32x32xf32, #tpu.memory_space<vmem>>, vector<32x32xf32>
    %cst_17 = arith.constant dense<0.000000e+00> : vector<16x32xf32>
    %20 = tpu.matmul %10, %19, %cst_17 {dimension_numbers = #tpu.dot_dimension_numbers<[1], [0], [0], [1], [0, 0, 1, 1], [], []>} : vector<16x32xf32>, vector<32x32xf32>, vector<16x32xf32> -> vector<16x32xf32>
    %c0_18 = arith.constant 0 : index
    %c0_19 = arith.constant 0 : index
    %21 = vector.load %arg9[%c0_18, %c0_19] : memref<16x32xf32, #tpu.memory_space<vmem>>, vector<16x32xf32>
    %c0_20 = arith.constant 0 : index
    %c0_21 = arith.constant 0 : index
    %22 = vector.load %arg10[%c0_20, %c0_21] : memref<16x32xf32, #tpu.memory_space<vmem>>, vector<16x32xf32>
    %23 = arith.mulf %12, %21 : vector<16x32xf32>
    %24 = arith.mulf %18, %22 : vector<16x32xf32>
    %25 = arith.addf %23, %24 : vector<16x32xf32>
    %26 = arith.mulf %14, %21 : vector<16x32xf32>
    %27 = arith.mulf %20, %22 : vector<16x32xf32>
    %28 = arith.addf %26, %27 : vector<16x32xf32>
    %c0_22 = arith.constant 0 : index
    %c0_23 = arith.constant 0 : index
    %29 = vector.load %arg11[%c0_22, %c0_23] : memref<16x16xf32, #tpu.memory_space<vmem>>, vector<16x16xf32>
    %30 = tpu.iota {dimensions = array<i32: 1>} : vector<16x32xi32>
    %cst_24 = arith.constant 0.000000e+00 : f32
    %31 = vector.broadcast %cst_24 : f32 to vector<16x32xf32>
    %c0_i32 = arith.constant 0 : i32
    %32 = vector.broadcast %c0_i32 : i32 to vector<16x32xi32>
    %33 = arith.cmpi sge, %30, %32 : vector<16x32xi32>
    %c8_i32 = arith.constant 8 : i32
    %34 = vector.broadcast %c8_i32 : i32 to vector<16x32xi32>
    %35 = arith.cmpi slt, %30, %34 : vector<16x32xi32>
    %36 = arith.andi %33, %35 : vector<16x32xi1>
    %cst_25 = arith.constant 0.000000e+00 : f32
    %37 = vector.broadcast %cst_25 : f32 to vector<16x32xf32>
    %38 = arith.select %36, %25, %37 : vector<16x32xi1>, vector<16x32xf32>
    %cst_26 = arith.constant dense<0.000000e+00> : vector<16x16xf32>
    %39 = tpu.matmul %38, %28, %cst_26 {dimension_numbers = #tpu.dot_dimension_numbers<[1], [1], [0], [0], [0, 0, 1, 0], [], []>} : vector<16x32xf32>, vector<16x32xf32>, vector<16x16xf32> -> vector<16x16xf32>
    %40 = arith.addf %39, %29 : vector<16x16xf32>
    %cst_27 = arith.constant dense<0xFF800000> : vector<16xf32>
    %41 = vector.multi_reduction <maximumf>, %40, %cst_27 [1] : vector<16x16xf32> to vector<16xf32>
    %42 = vector.shape_cast %41 : vector<16xf32> to vector<16x1xf32>
    %43 = vector.broadcast %42 : vector<16x1xf32> to vector<16x16xf32>
    %44 = arith.subf %40, %43 : vector<16x16xf32>
    %45 = math.exp %44 : vector<16x16xf32>
    %cst_28 = arith.constant dense<0.000000e+00> : vector<16xf32>
    %46 = vector.multi_reduction <add>, %45, %cst_28 [1] : vector<16x16xf32> to vector<16xf32>
    %47 = vector.shape_cast %46 : vector<16xf32> to vector<16x1xf32>
    %48 = vector.broadcast %47 : vector<16x1xf32> to vector<16x16xf32>
    %49 = arith.divf %45, %48 : vector<16x16xf32>
    %cst_29 = arith.constant dense<0.000000e+00> : vector<16x32xf32>
    %50 = tpu.matmul %49, %16, %cst_29 {dimension_numbers = #tpu.dot_dimension_numbers<[1], [0], [0], [1], [0, 0, 1, 1], [], []>} : vector<16x16xf32>, vector<16x32xf32>, vector<16x32xf32> -> vector<16x32xf32>
    %cst_30 = arith.constant 0.000000e+00 : f32
    %51 = vector.broadcast %cst_30 : f32 to vector<16x32xf32>
    %52 = arith.select %36, %50, %51 : vector<16x32xi1>, vector<16x32xf32>
    %53 = arith.addf %31, %52 : vector<16x32xf32>
    %c8_i32_31 = arith.constant 8 : i32
    %54 = vector.broadcast %c8_i32_31 : i32 to vector<16x32xi32>
    %55 = arith.cmpi sge, %30, %54 : vector<16x32xi32>
    %c16_i32 = arith.constant 16 : i32
    %56 = vector.broadcast %c16_i32 : i32 to vector<16x32xi32>
    %57 = arith.cmpi slt, %30, %56 : vector<16x32xi32>
    %58 = arith.andi %55, %57 : vector<16x32xi1>
    %cst_32 = arith.constant 0.000000e+00 : f32
    %59 = vector.broadcast %cst_32 : f32 to vector<16x32xf32>
    %60 = arith.select %58, %25, %59 : vector<16x32xi1>, vector<16x32xf32>
    %cst_33 = arith.constant dense<0.000000e+00> : vector<16x16xf32>
    %61 = tpu.matmul %60, %28, %cst_33 {dimension_numbers = #tpu.dot_dimension_numbers<[1], [1], [0], [0], [0, 0, 1, 0], [], []>} : vector<16x32xf32>, vector<16x32xf32>, vector<16x16xf32> -> vector<16x16xf32>
    %62 = arith.addf %61, %29 : vector<16x16xf32>
    %cst_34 = arith.constant dense<0xFF800000> : vector<16xf32>
    %63 = vector.multi_reduction <maximumf>, %62, %cst_34 [1] : vector<16x16xf32> to vector<16xf32>
    %64 = vector.shape_cast %63 : vector<16xf32> to vector<16x1xf32>
    %65 = vector.broadcast %64 : vector<16x1xf32> to vector<16x16xf32>
    %66 = arith.subf %62, %65 : vector<16x16xf32>
    %67 = math.exp %66 : vector<16x16xf32>
    %cst_35 = arith.constant dense<0.000000e+00> : vector<16xf32>
    %68 = vector.multi_reduction <add>, %67, %cst_35 [1] : vector<16x16xf32> to vector<16xf32>
    %69 = vector.shape_cast %68 : vector<16xf32> to vector<16x1xf32>
    %70 = vector.broadcast %69 : vector<16x1xf32> to vector<16x16xf32>
    %71 = arith.divf %67, %70 : vector<16x16xf32>
    %cst_36 = arith.constant dense<0.000000e+00> : vector<16x32xf32>
    %72 = tpu.matmul %71, %16, %cst_36 {dimension_numbers = #tpu.dot_dimension_numbers<[1], [0], [0], [1], [0, 0, 1, 1], [], []>} : vector<16x16xf32>, vector<16x32xf32>, vector<16x32xf32> -> vector<16x32xf32>
    %cst_37 = arith.constant 0.000000e+00 : f32
    %73 = vector.broadcast %cst_37 : f32 to vector<16x32xf32>
    %74 = arith.select %58, %72, %73 : vector<16x32xi1>, vector<16x32xf32>
    %75 = arith.addf %53, %74 : vector<16x32xf32>
    %c16_i32_38 = arith.constant 16 : i32
    %76 = vector.broadcast %c16_i32_38 : i32 to vector<16x32xi32>
    %77 = arith.cmpi sge, %30, %76 : vector<16x32xi32>
    %c24_i32 = arith.constant 24 : i32
    %78 = vector.broadcast %c24_i32 : i32 to vector<16x32xi32>
    %79 = arith.cmpi slt, %30, %78 : vector<16x32xi32>
    %80 = arith.andi %77, %79 : vector<16x32xi1>
    %cst_39 = arith.constant 0.000000e+00 : f32
    %81 = vector.broadcast %cst_39 : f32 to vector<16x32xf32>
    %82 = arith.select %80, %25, %81 : vector<16x32xi1>, vector<16x32xf32>
    %cst_40 = arith.constant dense<0.000000e+00> : vector<16x16xf32>
    %83 = tpu.matmul %82, %28, %cst_40 {dimension_numbers = #tpu.dot_dimension_numbers<[1], [1], [0], [0], [0, 0, 1, 0], [], []>} : vector<16x32xf32>, vector<16x32xf32>, vector<16x16xf32> -> vector<16x16xf32>
    %84 = arith.addf %83, %29 : vector<16x16xf32>
    %cst_41 = arith.constant dense<0xFF800000> : vector<16xf32>
    %85 = vector.multi_reduction <maximumf>, %84, %cst_41 [1] : vector<16x16xf32> to vector<16xf32>
    %86 = vector.shape_cast %85 : vector<16xf32> to vector<16x1xf32>
    %87 = vector.broadcast %86 : vector<16x1xf32> to vector<16x16xf32>
    %88 = arith.subf %84, %87 : vector<16x16xf32>
    %89 = math.exp %88 : vector<16x16xf32>
    %cst_42 = arith.constant dense<0.000000e+00> : vector<16xf32>
    %90 = vector.multi_reduction <add>, %89, %cst_42 [1] : vector<16x16xf32> to vector<16xf32>
    %91 = vector.shape_cast %90 : vector<16xf32> to vector<16x1xf32>
    %92 = vector.broadcast %91 : vector<16x1xf32> to vector<16x16xf32>
    %93 = arith.divf %89, %92 : vector<16x16xf32>
    %cst_43 = arith.constant dense<0.000000e+00> : vector<16x32xf32>
    %94 = tpu.matmul %93, %16, %cst_43 {dimension_numbers = #tpu.dot_dimension_numbers<[1], [0], [0], [1], [0, 0, 1, 1], [], []>} : vector<16x16xf32>, vector<16x32xf32>, vector<16x32xf32> -> vector<16x32xf32>
    %cst_44 = arith.constant 0.000000e+00 : f32
    %95 = vector.broadcast %cst_44 : f32 to vector<16x32xf32>
    %96 = arith.select %80, %94, %95 : vector<16x32xi1>, vector<16x32xf32>
    %97 = arith.addf %75, %96 : vector<16x32xf32>
    %c24_i32_45 = arith.constant 24 : i32
    %98 = vector.broadcast %c24_i32_45 : i32 to vector<16x32xi32>
    %99 = arith.cmpi sge, %30, %98 : vector<16x32xi32>
    %c32_i32 = arith.constant 32 : i32
    %100 = vector.broadcast %c32_i32 : i32 to vector<16x32xi32>
    %101 = arith.cmpi slt, %30, %100 : vector<16x32xi32>
    %102 = arith.andi %99, %101 : vector<16x32xi1>
    %cst_46 = arith.constant 0.000000e+00 : f32
    %103 = vector.broadcast %cst_46 : f32 to vector<16x32xf32>
    %104 = arith.select %102, %25, %103 : vector<16x32xi1>, vector<16x32xf32>
    %cst_47 = arith.constant dense<0.000000e+00> : vector<16x16xf32>
    %105 = tpu.matmul %104, %28, %cst_47 {dimension_numbers = #tpu.dot_dimension_numbers<[1], [1], [0], [0], [0, 0, 1, 0], [], []>} : vector<16x32xf32>, vector<16x32xf32>, vector<16x16xf32> -> vector<16x16xf32>
    %106 = arith.addf %105, %29 : vector<16x16xf32>
    %cst_48 = arith.constant dense<0xFF800000> : vector<16xf32>
    %107 = vector.multi_reduction <maximumf>, %106, %cst_48 [1] : vector<16x16xf32> to vector<16xf32>
    %108 = vector.shape_cast %107 : vector<16xf32> to vector<16x1xf32>
    %109 = vector.broadcast %108 : vector<16x1xf32> to vector<16x16xf32>
    %110 = arith.subf %106, %109 : vector<16x16xf32>
    %111 = math.exp %110 : vector<16x16xf32>
    %cst_49 = arith.constant dense<0.000000e+00> : vector<16xf32>
    %112 = vector.multi_reduction <add>, %111, %cst_49 [1] : vector<16x16xf32> to vector<16xf32>
    %113 = vector.shape_cast %112 : vector<16xf32> to vector<16x1xf32>
    %114 = vector.broadcast %113 : vector<16x1xf32> to vector<16x16xf32>
    %115 = arith.divf %111, %114 : vector<16x16xf32>
    %cst_50 = arith.constant dense<0.000000e+00> : vector<16x32xf32>
    %116 = tpu.matmul %115, %16, %cst_50 {dimension_numbers = #tpu.dot_dimension_numbers<[1], [0], [0], [1], [0, 0, 1, 1], [], []>} : vector<16x16xf32>, vector<16x32xf32>, vector<16x32xf32> -> vector<16x32xf32>
    %cst_51 = arith.constant 0.000000e+00 : f32
    %117 = vector.broadcast %cst_51 : f32 to vector<16x32xf32>
    %118 = arith.select %102, %116, %117 : vector<16x32xi1>, vector<16x32xf32>
    %119 = arith.addf %97, %118 : vector<16x32xf32>
    %c0_52 = arith.constant 0 : index
    %c0_53 = arith.constant 0 : index
    %120 = vector.load %arg6[%c0_52, %c0_53] : memref<32x32xf32, #tpu.memory_space<vmem>>, vector<32x32xf32>
    %cst_54 = arith.constant dense<0.000000e+00> : vector<16x32xf32>
    %121 = tpu.matmul %119, %120, %cst_54 {dimension_numbers = #tpu.dot_dimension_numbers<[1], [0], [0], [1], [0, 0, 1, 1], [], []>} : vector<16x32xf32>, vector<32x32xf32>, vector<16x32xf32> -> vector<16x32xf32>
    %122 = arith.addf %0, %121 : vector<16x32xf32>
    %123 = arith.mulf %122, %122 : vector<16x32xf32>
    %cst_55 = arith.constant dense<0.000000e+00> : vector<16xf32>
    %124 = vector.multi_reduction <add>, %123, %cst_55 [1] : vector<16x32xf32> to vector<16xf32>
    %125 = vector.shape_cast %124 : vector<16xf32> to vector<16x1xf32>
    %cst_56 = arith.constant 3.200000e+01 : f32
    %126 = vector.broadcast %cst_56 : f32 to vector<16x1xf32>
    %127 = arith.divf %125, %126 : vector<16x1xf32>
    %cst_57 = arith.constant 9.99999974E-6 : f32
    %128 = vector.broadcast %cst_57 : f32 to vector<16x1xf32>
    %129 = arith.addf %127, %128 : vector<16x1xf32>
    %130 = math.rsqrt %129 : vector<16x1xf32>
    %131 = vector.broadcast %130 : vector<16x1xf32> to vector<16x32xf32>
    %132 = arith.mulf %122, %131 : vector<16x32xf32>
    %c0_58 = arith.constant 0 : index
    %c0_59 = arith.constant 0 : index
    %133 = vector.load %arg7[%c0_58, %c0_59] : memref<32x128xf32, #tpu.memory_space<vmem>>, vector<32x128xf32>
    %cst_60 = arith.constant dense<0.000000e+00> : vector<16x128xf32>
    %134 = tpu.matmul %132, %133, %cst_60 {dimension_numbers = #tpu.dot_dimension_numbers<[1], [0], [0], [1], [0, 0, 1, 1], [], []>} : vector<16x32xf32>, vector<32x128xf32>, vector<16x128xf32> -> vector<16x128xf32>
    %cst_61 = arith.constant 5.000000e-01 : f32
    %135 = vector.broadcast %cst_61 : f32 to vector<16x128xf32>
    %136 = arith.mulf %135, %134 : vector<16x128xf32>
    %cst_62 = arith.constant 0.707106769 : f32
    %137 = vector.broadcast %cst_62 : f32 to vector<16x128xf32>
    %138 = arith.mulf %134, %137 : vector<16x128xf32>
    %cst_63 = arith.constant 0.000000e+00 : f32
    %139 = vector.broadcast %cst_63 : f32 to vector<16x128xf32>
    %140 = arith.cmpf olt, %138, %139 : vector<16x128xf32>
    %cst_64 = arith.constant -1.000000e+00 : f32
    %cst_65 = arith.constant 1.000000e+00 : f32
    %141 = vector.broadcast %cst_64 : f32 to vector<16x128xf32>
    %142 = vector.broadcast %cst_65 : f32 to vector<16x128xf32>
    %143 = arith.select %140, %141, %142 : vector<16x128xi1>, vector<16x128xf32>
    %144 = math.absf %138 : vector<16x128xf32>
    %cst_66 = arith.constant 0.327591091 : f32
    %145 = vector.broadcast %cst_66 : f32 to vector<16x128xf32>
    %146 = arith.mulf %145, %144 : vector<16x128xf32>
    %cst_67 = arith.constant 1.000000e+00 : f32
    %147 = vector.broadcast %cst_67 : f32 to vector<16x128xf32>
    %148 = arith.addf %147, %146 : vector<16x128xf32>
    %cst_68 = arith.constant 1.000000e+00 : f32
    %149 = vector.broadcast %cst_68 : f32 to vector<16x128xf32>
    %150 = arith.divf %149, %148 : vector<16x128xf32>
    %cst_69 = arith.constant 1.06140542 : f32
    %151 = vector.broadcast %cst_69 : f32 to vector<16x128xf32>
    %152 = arith.mulf %151, %150 : vector<16x128xf32>
    %cst_70 = arith.constant -1.45315206 : f32
    %153 = vector.broadcast %cst_70 : f32 to vector<16x128xf32>
    %154 = arith.addf %152, %153 : vector<16x128xf32>
    %155 = arith.mulf %154, %150 : vector<16x128xf32>
    %cst_71 = arith.constant 1.42141378 : f32
    %156 = vector.broadcast %cst_71 : f32 to vector<16x128xf32>
    %157 = arith.addf %155, %156 : vector<16x128xf32>
    %158 = arith.mulf %157, %150 : vector<16x128xf32>
    %cst_72 = arith.constant -0.284496725 : f32
    %159 = vector.broadcast %cst_72 : f32 to vector<16x128xf32>
    %160 = arith.addf %158, %159 : vector<16x128xf32>
    %161 = arith.mulf %160, %150 : vector<16x128xf32>
    %cst_73 = arith.constant 0.254829586 : f32
    %162 = vector.broadcast %cst_73 : f32 to vector<16x128xf32>
    %163 = arith.addf %161, %162 : vector<16x128xf32>
    %164 = arith.mulf %163, %150 : vector<16x128xf32>
    %cst_74 = arith.constant 0.000000e+00 : f32
    %165 = vector.broadcast %cst_74 : f32 to vector<16x128xf32>
    %166 = arith.subf %165, %144 : vector<16x128xf32>
    %167 = arith.mulf %166, %144 : vector<16x128xf32>
    %168 = math.exp %167 : vector<16x128xf32>
    %169 = arith.mulf %164, %168 : vector<16x128xf32>
    %cst_75 = arith.constant 1.000000e+00 : f32
    %170 = vector.broadcast %cst_75 : f32 to vector<16x128xf32>
    %171 = arith.subf %170, %169 : vector<16x128xf32>
    %172 = arith.mulf %143, %171 : vector<16x128xf32>
    %cst_76 = arith.constant 1.000000e+00 : f32
    %173 = vector.broadcast %cst_76 : f32 to vector<16x128xf32>
    %174 = arith.addf %173, %172 : vector<16x128xf32>
    %175 = arith.mulf %136, %174 : vector<16x128xf32>
    %c0_77 = arith.constant 0 : index
    %c0_78 = arith.constant 0 : index
    %176 = vector.load %arg8[%c0_77, %c0_78] : memref<128x32xf32, #tpu.memory_space<vmem>>, vector<128x32xf32>
    %cst_79 = arith.constant dense<0.000000e+00> : vector<16x32xf32>
    %177 = tpu.matmul %175, %176, %cst_79 {dimension_numbers = #tpu.dot_dimension_numbers<[1], [0], [0], [1], [0, 0, 1, 1], [], []>} : vector<16x128xf32>, vector<128x32xf32>, vector<16x32xf32> -> vector<16x32xf32>
    %178 = arith.addf %122, %177 : vector<16x32xf32>
    %c0_80 = arith.constant 0 : index
    %c0_81 = arith.constant 0 : index
    %179 = vector.load %arg12[%c0_80, %c0_81] : memref<16x32xf32, #tpu.memory_space<vmem>>, vector<16x32xf32>
    tpu.vector_store %arg12[%c0_80, %c0_81], %178 {strides = array<i32>} : memref<16x32xf32, #tpu.memory_space<vmem>>, vector<16x32xf32>,
    return
  }
}

</mosaic_0001>

<llo_original>
// kernel: tile.23
$region0: #{tile.23}
  #allocation0 [shape = 's32[1]{0}', space=sflag, size = 0x4, scoped, tag = 'scoped memory for tile.23']
  %s0 = inlined_call_operand.vmem [shape: f32[2], index: 0, kind: input, shape index: {}]
  %s1 = inlined_call_operand.vmem [shape: f32[4,2], index: 1, kind: output, shape index: {}]
  // Predicated region
  $region2: #{tile.23} parent=0 // pred_check
    _
  $region3: #{tile.23} parent=0 // pred_check_branch
    %3 = sbr.rel (0) target = $region5
  $region4: #{tile.23} parent=0 // pred_region
    _
  $region5: #{tile.23} parent=0 // pred_fallthru
    _
  %v4 = vld [vmem:[%s0] ss:$0 sm:$0xff]
  %5 = vst [vmem:[%s1] sm:$0xf] %v4

// kernel: block_forward.1
$region0: #{block_forward.1}
  #allocation0 [shape = 'u32[]', space=smem, size = 0x4, offset = 0x4, fixed_abs, tag = 'smem constant byte address 0x4 - core index']
  #allocation1 [shape = 'u32[144,128]{1,0:T(1,128)}', space=vmem, size = 0x12000, scoped, tag = 'internal scratch']
  %s0 = inlined_call_operand.vmem [shape: f32[16,32], index: 0, kind: input, shape index: {}]
  %s1 = inlined_call_operand.vmem [shape: f32[32,32], index: 1, kind: input, shape index: {}]
  %s2 = inlined_call_operand.vmem [shape: f32[32,32], index: 2, kind: input, shape index: {}]
  %s3 = inlined_call_operand.vmem [shape: f32[32,32], index: 3, kind: input, shape index: {}]
  %s4 = inlined_call_operand.vmem [shape: f32[32,32], index: 4, kind: input, shape index: {}]
  %s5 = inlined_call_operand.vmem [shape: f32[32,32], index: 5, kind: input, shape index: {}]
  %s6 = inlined_call_operand.vmem [shape: f32[32,32], index: 6, kind: input, shape index: {}]
  %s7 = inlined_call_operand.vmem [shape: f32[32,128], index: 7, kind: input, shape index: {}]
  %s8 = inlined_call_operand.vmem [shape: f32[128,32], index: 8, kind: input, shape index: {}]
  %s9 = inlined_call_operand.vmem [shape: f32[16,32], index: 9, kind: input, shape index: {}]
  %s10 = inlined_call_operand.vmem [shape: f32[16,32], index: 10, kind: input, shape index: {}]
  %s11 = inlined_call_operand.vmem [shape: f32[16,16], index: 11, kind: input, shape index: {}]
  %s12 = inlined_call_operand.hbm [shape: f32[16,32], index: 12, kind: output, shape index: {}]
  %s13 = sld [smem:[#allocation0]]
  $region58: #{block_forward.1} parent=0
    _
  %s15 = ssub.s32 1, %s13
  %s16 = scalar_select 0, %s15, %s13
  $region1: #{block_forward.1} parent=0
    #allocation2 [shape = 'u8[8192]{0}', space=vmem, size = 0x2000, scoped, tag = 'output window, operand 0, single buffered']
    #allocation3 [shape = 's32[1]{0}', space=sflag, size = 0x4, scoped, tag = 'scoped memory for block_forward.1']
    %17 = vsyncpa [#allocation3], 0
    // Predicated region
    $region2: #{block_forward.1} parent=1 // pred_check
      _
    $region3: #{block_forward.1} parent=1 // pred_check_branch
      %19 = sbr.rel (0) target = $region5
    $region4: #{block_forward.1} parent=1 // pred_region
      _
    $region5: #{block_forward.1} parent=1 // pred_fallthru
      _
    // Predicated region
    $region6: #{block_forward.1} parent=1 // pred_check
      _
    $region7: #{block_forward.1} parent=1 // pred_check_branch
      %21 = sbr.rel (0) target = $region9
    $region8: #{block_forward.1} parent=1 // pred_region
      _
    $region9: #{block_forward.1} parent=1 // pred_fallthru
      _
    // Predicated region
    $region10: #{block_forward.1} parent=1 // pred_check
      _
    $region11: #{block_forward.1} parent=1 // pred_check_branch
      %23 = sbr.rel (0) target = $region13
    $region12: #{block_forward.1} parent=1 // pred_region
      _
    $region13: #{block_forward.1} parent=1 // pred_fallthru
      _
    // Predicated region
    $region14: #{block_forward.1} parent=1 // pred_check
      _
    $region15: #{block_forward.1} parent=1 // pred_check_branch
      %25 = sbr.rel (0) target = $region17
    $region16: #{block_forward.1} parent=1 // pred_region
      _
    $region17: #{block_forward.1} parent=1 // pred_fallthru
      _
    // Predicated region
    $region18: #{block_forward.1} parent=1 // pred_check
      _
    $region19: #{block_forward.1} parent=1 // pred_check_branch
      %27 = sbr.rel (0) target = $region21
    $region20: #{block_forward.1} parent=1 // pred_region
      _
    $region21: #{block_forward.1} parent=1 // pred_fallthru
      _
    // Predicated region
    $region22: #{block_forward.1} parent=1 // pred_check
      _
    $region23: #{block_forward.1} parent=1 // pred_check_branch
      %29 = sbr.rel (0) target = $region25
    $region24: #{block_forward.1} parent=1 // pred_region
      _
    $region25: #{block_forward.1} parent=1 // pred_fallthru
      _
    // Predicated region
    $region26: #{block_forward.1} parent=1 // pred_check
      _
    $region27: #{block_forward.1} parent=1 // pred_check_branch
      %31 = sbr.rel (0) target = $region29
    $region28: #{block_forward.1} parent=1 // pred_region
      _
    $region29: #{block_forward.1} parent=1 // pred_fallthru
      _
    // Predicated region
    $region30: #{block_forward.1} parent=1 // pred_check
      _
    $region31: #{block_forward.1} parent=1 // pred_check_branch
      %33 = sbr.rel (0) target = $region33
    $region32: #{block_forward.1} parent=1 // pred_region
      _
    $region33: #{block_forward.1} parent=1 // pred_fallthru
      _
    // Predicated region
    $region34: #{block_forward.1} parent=1 // pred_check
      _
    $region35: #{block_forward.1} parent=1 // pred_check_branch
      %35 = sbr.rel (0) target = $region37
    $region36: #{block_forward.1} parent=1 // pred_region
      _
    $region37: #{block_forward.1} parent=1 // pred_fallthru
      _
    // Predicated region
    $region38: #{block_forward.1} parent=1 // pred_check
      _
    $region39: #{block_forward.1} parent=1 // pred_check_branch
      %37 = sbr.rel (0) target = $region41
    $region40: #{block_forward.1} parent=1 // pred_region
      _
    $region41: #{block_forward.1} parent=1 // pred_fallthru
      _
    // Predicated region
    $region42: #{block_forward.1} parent=1 // pred_check
      _
    $region43: #{block_forward.1} parent=1 // pred_check_branch
      %39 = sbr.rel (0) target = $region45
    $region44: #{block_forward.1} parent=1 // pred_region
      _
    $region45: #{block_forward.1} parent=1 // pred_fallthru
      _
    // Predicated region
    $region46: #{block_forward.1} parent=1 // pred_check
      _
    $region47: #{block_forward.1} parent=1 // pred_check_branch
      %41 = sbr.rel (0) target = $region49
    $region48: #{block_forward.1} parent=1 // pred_region
      _
    $region49: #{block_forward.1} parent=1 // pred_fallthru
      _
    %v42 = vld [vmem:[%s0] sm:$0xff]
    %v43 = vld [vmem:[%s0 + $0x8] sm:$0xff]
    %v44 = vmul.f32 %v42, %v42
    %v45 = vmul.f32 %v43, %v43
    %vm46 = vcmask 261120
    %v47 = vsel %vm46, %v44, 0.0
    %48 = vadd.xlane.f32.xlu0 %v47
    %v49 = vpop.xlane.xlu0 %48
    %v50 = vsel %vm46, %v45, 0.0
    %51 = vadd.xlane.f32.xlu0 %v50
    %v52 = vpop.xlane.xlu0 %51
    %v53 = vrcp.pop 32.0
    %v54 = vmul.f32 %v49, %v53
    %v55 = vmul.f32 %v52, %v53
    %v56 = vadd.f32 %v54, 1e-05
    %v57 = vadd.f32 %v55, 1e-05
    %v58 = vrsqrt.pop %v56
    %v59 = vrsqrt.pop %v57
    %v60 = vmul.f32 %v42, %v58
    %v61 = vmul.f32 %v43, %v59
    %v62 = vld [vmem:[%s1] sm:$0xff]
    %v63 = vld [vmem:[%s1 + $0x8] sm:$0xff]
    %v64 = vld [vmem:[%s1 + $0x10] sm:$0xff]
    %v65 = vld [vmem:[%s1 + $0x18] sm:$0xff]
    %v67 = vsel %vm46, %v60, 0
    %v70 = vsel %vm46, %v61, 0
    %72 = vmatprep.subr.mxu0 0.0
    %73 = vmatpush1.msra.mxu0 %v62
    %74 = vmatprep.subr.mxu0 0.0
    %75 = vmatpush1.msra.mxu0 %v63
    %76 = vmatprep.subr.mxu0 0.0
    %77 = vmatpush1.msra.mxu0 %v64
    %78 = vmatprep.subr.mxu0 0.0
    %79 = vmatpush1.msra.mxu0 %v65
    %80 = vmatprep.subr.mxu0 0.0
    %81 = vmatpush1.msra.mxu0 0.0
    %82 = vmatprep.subr.mxu0 0.0
    %83 = vmatpush1.msra.mxu0 0.0
    %84 = vmatprep.subr.mxu0 0.0
    %85 = vmatpush1.msra.mxu0 0.0
    %86 = vmatprep.subr.mxu0 0.0
    %87 = vmatpush1.msra.mxu0 0.0
    %88 = vmatprep.subr.mxu0 0.0
    %89 = vmatpush1.msra.mxu0 0.0
    %90 = vmatprep.subr.mxu0 0.0
    %91 = vmatpush1.msra.mxu0 0.0
    %92 = vmatprep.subr.mxu0 0.0
    %93 = vmatpush1.msra.mxu0 0.0
    %94 = vmatprep.subr.mxu0 0.0
    %95 = vmatpush1.msra.mxu0 0.0
    %96 = vmatprep.subr.mxu0 0.0
    %97 = vmatpush1.msra.mxu0 0.0
    %98 = vmatprep.subr.mxu0 0.0
    %99 = vmatpush1.msra.mxu0 0.0
    %100 = vmatprep.subr.mxu0 0.0
    %101 = vmatpush1.msra.mxu0 0.0
    %102 = vmatprep.subr.mxu0 0.0
    %103 = vmatpush1.msra.mxu0 0.0
    %104 = vmatprep.subr.mxu0 0.0
    %105 = vmatpush1.msra.mxu0 0.0
    %106 = vmatprep.subr.mxu0 0.0
    %107 = vmatpush1.msra.mxu0 0.0
    %108 = vmatprep.subr.mxu0 0.0
    %109 = vmatpush1.msra.mxu0 0.0
    %110 = vmatprep.subr.mxu0 0.0
    %111 = vmatpush1.msra.mxu0 0.0
    %112 = vmatprep.subr.mxu0 0.0
    %113 = vmatpush1.msra.mxu0 0.0
    %114 = vmatprep.subr.mxu0 0.0
    %115 = vmatpush1.msra.mxu0 0.0
    %116 = vmatprep.subr.mxu0 0.0
    %117 = vmatpush1.msra.mxu0 0.0
    %118 = vmatprep.subr.mxu0 0.0
    %119 = vmatpush1.msra.mxu0 0.0
    %120 = vmatprep.subr.mxu0 0.0
    %121 = vmatpush1.msra.mxu0 0.0
    %122 = vmatprep.subr.mxu0 0.0
    %123 = vmatpush1.msra.mxu0 0.0
    %124 = vmatprep.subr.mxu0 0.0
    %125 = vmatpush1.msra.mxu0 0.0
    %126 = vmatprep.subr.mxu0 0.0
    %127 = vmatpush1.msra.mxu0 0.0
    %128 = vmatprep.subr.mxu0 0.0
    %129 = vmatpush1.msra.mxu0 0.0
    %130 = vmatprep.subr.mxu0 0.0
    %131 = vmatpush1.msra.mxu0 0.0
    %132 = vmatprep.subr.mxu0 0.0
    %133 = vmatpush1.msra.mxu0 0.0
    %134 = vmatprep.subr.mxu0 0.0
    %135 = vmatpush1.msra.mxu0 0.0
    %136 = vmatprep.mubr.f32.mxu0 0.0
    %137 = vmatmul.mubr.f32.gmra.mrb[0].mxu0 %v67
    %v138 = vpop.f32.mrb[0].mxu0
    %v139 = vadd.f32 0.0, %v138
    %v140 = vpop.f32.mrb[0].mxu0
    %141 = vmatprep.mubr.f32.mxu0 0.0
    %142 = vmatmul.mubr.f32.gmra.mrb[0].mxu0 %v70
    %v143 = vpop.f32.mrb[0].mxu0
    %v144 = vadd.f32 0.0, %v143
    %v145 = vpop.f32.mrb[0].mxu0
    %146 = vdwg.mxu0
    %v147 = vld [vmem:[%s2] sm:$0xff]
    %v148 = vld [vmem:[%s2 + $0x8] sm:$0xff]
    %v149 = vld [vmem:[%s2 + $0x10] sm:$0xff]
    %v150 = vld [vmem:[%s2 + $0x18] sm:$0xff]
    %151 = vmatprep.subr.mxu0 0.0
    %152 = vmatpush1.msra.mxu0 %v147
    %153 = vmatprep.subr.mxu0 0.0
    %154 = vmatpush1.msra.mxu0 %v148
    %155 = vmatprep.subr.mxu0 0.0
    %156 = vmatpush1.msra.mxu0 %v149
    %157 = vmatprep.subr.mxu0 0.0
    %158 = vmatpush1.msra.mxu0 %v150
    %159 = vmatprep.subr.mxu0 0.0
    %160 = vmatpush1.msra.mxu0 0.0
    %161 = vmatprep.subr.mxu0 0.0
    %162 = vmatpush1.msra.mxu0 0.0
    %163 = vmatprep.subr.mxu0 0.0
    %164 = vmatpush1.msra.mxu0 0.0
    %165 = vmatprep.subr.mxu0 0.0
    %166 = vmatpush1.msra.mxu0 0.0
    %167 = vmatprep.subr.mxu0 0.0
    %168 = vmatpush1.msra.mxu0 0.0
    %169 = vmatprep.subr.mxu0 0.0
    %170 = vmatpush1.msra.mxu0 0.0
    %171 = vmatprep.subr.mxu0 0.0
    %172 = vmatpush1.msra.mxu0 0.0
    %173 = vmatprep.subr.mxu0 0.0
    %174 = vmatpush1.msra.mxu0 0.0
    %175 = vmatprep.subr.mxu0 0.0
    %176 = vmatpush1.msra.mxu0 0.0
    %177 = vmatprep.subr.mxu0 0.0
    %178 = vmatpush1.msra.mxu0 0.0
    %179 = vmatprep.subr.mxu0 0.0
    %180 = vmatpush1.msra.mxu0 0.0
    %181 = vmatprep.subr.mxu0 0.0
    %182 = vmatpush1.msra.mxu0 0.0
    %183 = vmatprep.subr.mxu0 0.0
    %184 = vmatpush1.msra.mxu0 0.0
    %185 = vmatprep.subr.mxu0 0.0
    %186 = vmatpush1.msra.mxu0 0.0
    %187 = vmatprep.subr.mxu0 0.0
    %188 = vmatpush1.msra.mxu0 0.0
    %189 = vmatprep.subr.mxu0 0.0
    %190 = vmatpush1.msra.mxu0 0.0
    %191 = vmatprep.subr.mxu0 0.0
    %192 = vmatpush1.msra.mxu0 0.0
    %193 = vmatprep.subr.mxu0 0.0
    %194 = vmatpush1.msra.mxu0 0.0
    %195 = vmatprep.subr.mxu0 0.0
    %196 = vmatpush1.msra.mxu0 0.0
    %197 = vmatprep.subr.mxu0 0.0
    %198 = vmatpush1.msra.mxu0 0.0
    %199 = vmatprep.subr.mxu0 0.0
    %200 = vmatpush1.msra.mxu0 0.0
    %201 = vmatprep.subr.mxu0 0.0
    %202 = vmatpush1.msra.mxu0 0.0
    %203 = vmatprep.subr.mxu0 0.0
    %204 = vmatpush1.msra.mxu0 0.0
    %205 = vmatprep.subr.mxu0 0.0
    %206 = vmatpush1.msra.mxu0 0.0
    %207 = vmatprep.subr.mxu0 0.0
    %208 = vmatpush1.msra.mxu0 0.0
    %209 = vmatprep.subr.mxu0 0.0
    %210 = vmatpush1.msra.mxu0 0.0
    %211 = vmatprep.subr.mxu0 0.0
    %212 = vmatpush1.msra.mxu0 0.0
    %213 = vmatprep.subr.mxu0 0.0
    %214 = vmatpush1.msra.mxu0 0.0
    %215 = vmatprep.mubr.f32.mxu0 0.0
    %216 = vmatmul.mubr.f32.gmra.mrb[0].mxu0 %v67
    %v217 = vpop.f32.mrb[0].mxu0
    %v218 = vadd.f32 0.0, %v217
    %v219 = vpop.f32.mrb[0].mxu0
    %220 = vmatprep.mubr.f32.mxu0 0.0
    %221 = vmatmul.mubr.f32.gmra.mrb[0].mxu0 %v70
    %v222 = vpop.f32.mrb[0].mxu0
    %v223 = vadd.f32 0.0, %v222
    %v224 = vpop.f32.mrb[0].mxu0
    %225 = vdwg.mxu0
    %v226 = vld [vmem:[%s3] sm:$0xff]
    %v227 = vld [vmem:[%s3 + $0x8] sm:$0xff]
    %v228 = vld [vmem:[%s3 + $0x10] sm:$0xff]
    %v229 = vld [vmem:[%s3 + $0x18] sm:$0xff]
    %230 = vmatprep.subr.mxu0 0.0
    %231 = vmatpush1.msra.mxu0 %v226
    %232 = vmatprep.subr.mxu0 0.0
    %233 = vmatpush1.msra.mxu0 %v227
    %234 = vmatprep.subr.mxu0 0.0
    %235 = vmatpush1.msra.mxu0 %v228
    %236 = vmatprep.subr.mxu0 0.0
    %237 = vmatpush1.msra.mxu0 %v229
    %238 = vmatprep.subr.mxu0 0.0
    %239 = vmatpush1.msra.mxu0 0.0
    %240 = vmatprep.subr.mxu0 0.0
    %241 = vmatpush1.msra.mxu0 0.0
    %242 = vmatprep.subr.mxu0 0.0
    %243 = vmatpush1.msra.mxu0 0.0
    %244 = vmatprep.subr.mxu0 0.0
    %245 = vmatpush1.msra.mxu0 0.0
    %246 = vmatprep.subr.mxu0 0.0
    %247 = vmatpush1.msra.mxu0 0.0
    %248 = vmatprep.subr.mxu0 0.0
    %249 = vmatpush1.msra.mxu0 0.0
    %250 = vmatprep.subr.mxu0 0.0
    %251 = vmatpush1.msra.mxu0 0.0
    %252 = vmatprep.subr.mxu0 0.0
    %253 = vmatpush1.msra.mxu0 0.0
    %254 = vmatprep.subr.mxu0 0.0
    %255 = vmatpush1.msra.mxu0 0.0
    %256 = vmatprep.subr.mxu0 0.0
    %257 = vmatpush1.msra.mxu0 0.0
    %258 = vmatprep.subr.mxu0 0.0
    %259 = vmatpush1.msra.mxu0 0.0
    %260 = vmatprep.subr.mxu0 0.0
    %261 = vmatpush1.msra.mxu0 0.0
    %262 = vmatprep.subr.mxu0 0.0
    %263 = vmatpush1.msra.mxu0 0.0
    %264 = vmatprep.subr.mxu0 0.0
    %265 = vmatpush1.msra.mxu0 0.0
    %266 = vmatprep.subr.mxu0 0.0
    %267 = vmatpush1.msra.mxu0 0.0
    %268 = vmatprep.subr.mxu0 0.0
    %269 = vmatpush1.msra.mxu0 0.0
    %270 = vmatprep.subr.mxu0 0.0
    %271 = vmatpush1.msra.mxu0 0.0
    %272 = vmatprep.subr.mxu0 0.0
    %273 = vmatpush1.msra.mxu0 0.0
    %274 = vmatprep.subr.mxu0 0.0
    %275 = vmatpush1.msra.mxu0 0.0
    %276 = vmatprep.subr.mxu0 0.0
    %277 = vmatpush1.msra.mxu0 0.0
    %278 = vmatprep.subr.mxu0 0.0
    %279 = vmatpush1.msra.mxu0 0.0
    %280 = vmatprep.subr.mxu0 0.0
    %281 = vmatpush1.msra.mxu0 0.0
    %282 = vmatprep.subr.mxu0 0.0
    %283 = vmatpush1.msra.mxu0 0.0
    %284 = vmatprep.subr.mxu0 0.0
    %285 = vmatpush1.msra.mxu0 0.0
    %286 = vmatprep.subr.mxu0 0.0
    %287 = vmatpush1.msra.mxu0 0.0
    %288 = vmatprep.subr.mxu0 0.0
    %289 = vmatpush1.msra.mxu0 0.0
    %290 = vmatprep.subr.mxu0 0.0
    %291 = vmatpush1.msra.mxu0 0.0
    %292 = vmatprep.subr.mxu0 0.0
    %293 = vmatpush1.msra.mxu0 0.0
    %294 = vmatprep.mubr.f32.mxu0 0.0
    %295 = vmatmul.mubr.f32.gmra.mrb[0].mxu0 %v67
    %v296 = vpop.f32.mrb[0].mxu0
    %v297 = vadd.f32 0.0, %v296
    %v298 = vpop.f32.mrb[0].mxu0
    %299 = vmatprep.mubr.f32.mxu0 0.0
    %300 = vmatmul.mubr.f32.gmra.mrb[0].mxu0 %v70
    %v301 = vpop.f32.mrb[0].mxu0
    %v302 = vadd.f32 0.0, %v301
    %v303 = vpop.f32.mrb[0].mxu0
    %304 = vdwg.mxu0
    %v305 = vld [vmem:[%s4] sm:$0xff]
    %v306 = vld [vmem:[%s4 + $0x8] sm:$0xff]
    %v307 = vld [vmem:[%s4 + $0x10] sm:$0xff]
    %v308 = vld [vmem:[%s4 + $0x18] sm:$0xff]
    %309 = vmatprep.subr.mxu0 0.0
    %310 = vmatpush1.msra.mxu0 %v305
    %311 = vmatprep.subr.mxu0 0.0
    %312 = vmatpush1.msra.mxu0 %v306
    %313 = vmatprep.subr.mxu0 0.0
    %314 = vmatpush1.msra.mxu0 %v307
    %315 = vmatprep.subr.mxu0 0.0
    %316 = vmatpush1.msra.mxu0 %v308
    %317 = vmatprep.subr.mxu0 0.0
    %318 = vmatpush1.msra.mxu0 0.0
    %319 = vmatprep.subr.mxu0 0.0
    %320 = vmatpush1.msra.mxu0 0.0
    %321 = vmatprep.subr.mxu0 0.0
    %322 = vmatpush1.msra.mxu0 0.0
    %323 = vmatprep.subr.mxu0 0.0
    %324 = vmatpush1.msra.mxu0 0.0
    %325 = vmatprep.subr.mxu0 0.0
    %326 = vmatpush1.msra.mxu0 0.0
    %327 = vmatprep.subr.mxu0 0.0
    %328 = vmatpush1.msra.mxu0 0.0
    %329 = vmatprep.subr.mxu0 0.0
    %330 = vmatpush1.msra.mxu0 0.0
    %331 = vmatprep.subr.mxu0 0.0
    %332 = vmatpush1.msra.mxu0 0.0
    %333 = vmatprep.subr.mxu0 0.0
    %334 = vmatpush1.msra.mxu0 0.0
    %335 = vmatprep.subr.mxu0 0.0
    %336 = vmatpush1.msra.mxu0 0.0
    %337 = vmatprep.subr.mxu0 0.0
    %338 = vmatpush1.msra.mxu0 0.0
    %339 = vmatprep.subr.mxu0 0.0
    %340 = vmatpush1.msra.mxu0 0.0
    %341 = vmatprep.subr.mxu0 0.0
    %342 = vmatpush1.msra.mxu0 0.0
    %343 = vmatprep.subr.mxu0 0.0
    %344 = vmatpush1.msra.mxu0 0.0
    %345 = vmatprep.subr.mxu0 0.0
    %346 = vmatpush1.msra.mxu0 0.0
    %347 = vmatprep.subr.mxu0 0.0
    %348 = vmatpush1.msra.mxu0 0.0
    %349 = vmatprep.subr.mxu0 0.0
    %350 = vmatpush1.msra.mxu0 0.0
    %351 = vmatprep.subr.mxu0 0.0
    %352 = vmatpush1.msra.mxu0 0.0
    %353 = vmatprep.subr.mxu0 0.0
    %354 = vmatpush1.msra.mxu0 0.0
    %355 = vmatprep.subr.mxu0 0.0
    %356 = vmatpush1.msra.mxu0 0.0
    %357 = vmatprep.subr.mxu0 0.0
    %358 = vmatpush1.msra.mxu0 0.0
    %359 = vmatprep.subr.mxu0 0.0
    %360 = vmatpush1.msra.mxu0 0.0
    %361 = vmatprep.subr.mxu0 0.0
    %362 = vmatpush1.msra.mxu0 0.0
    %363 = vmatprep.subr.mxu0 0.0
    %364 = vmatpush1.msra.mxu0 0.0
    %365 = vmatprep.subr.mxu0 0.0
    %366 = vmatpush1.msra.mxu0 0.0
    %367 = vmatprep.subr.mxu0 0.0
    %368 = vmatpush1.msra.mxu0 0.0
    %369 = vmatprep.subr.mxu0 0.0
    %370 = vmatpush1.msra.mxu0 0.0
    %371 = vmatprep.subr.mxu0 0.0
    %372 = vmatpush1.msra.mxu0 0.0
    %373 = vmatprep.mubr.f32.mxu0 0.0
    %374 = vmatmul.mubr.f32.gmra.mrb[0].mxu0 %v67
    %v375 = vpop.f32.mrb[0].mxu0
    %v376 = vadd.f32 0.0, %v375
    %v377 = vpop.f32.mrb[0].mxu0
    %378 = vmatprep.mubr.f32.mxu0 0.0
    %379 = vmatmul.mubr.f32.gmra.mrb[0].mxu0 %v70
    %v380 = vpop.f32.mrb[0].mxu0
    %v381 = vadd.f32 0.0, %v380
    %v382 = vpop.f32.mrb[0].mxu0
    %383 = vdwg.mxu0
    %v384 = vld [vmem:[%s5] sm:$0xff]
    %v385 = vld [vmem:[%s5 + $0x8] sm:$0xff]
    %v386 = vld [vmem:[%s5 + $0x10] sm:$0xff]
    %v387 = vld [vmem:[%s5 + $0x18] sm:$0xff]
    %388 = vmatprep.subr.mxu0 0.0
    %389 = vmatpush1.msra.mxu0 %v384
    %390 = vmatprep.subr.mxu0 0.0
    %391 = vmatpush1.msra.mxu0 %v385
    %392 = vmatprep.subr.mxu0 0.0
    %393 = vmatpush1.msra.mxu0 %v386
    %394 = vmatprep.subr.mxu0 0.0
    %395 = vmatpush1.msra.mxu0 %v387
    %396 = vmatprep.subr.mxu0 0.0
    %397 = vmatpush1.msra.mxu0 0.0
    %398 = vmatprep.subr.mxu0 0.0
    %399 = vmatpush1.msra.mxu0 0.0
    %400 = vmatprep.subr.mxu0 0.0
    %401 = vmatpush1.msra.mxu0 0.0
    %402 = vmatprep.subr.mxu0 0.0
    %403 = vmatpush1.msra.mxu0 0.0
    %404 = vmatprep.subr.mxu0 0.0
    %405 = vmatpush1.msra.mxu0 0.0
    %406 = vmatprep.subr.mxu0 0.0
    %407 = vmatpush1.msra.mxu0 0.0
    %408 = vmatprep.subr.mxu0 0.0
    %409 = vmatpush1.msra.mxu0 0.0
    %410 = vmatprep.subr.mxu0 0.0
    %411 = vmatpush1.msra.mxu0 0.0
    %412 = vmatprep.subr.mxu0 0.0
    %413 = vmatpush1.msra.mxu0 0.0
    %414 = vmatprep.subr.mxu0 0.0
    %415 = vmatpush1.msra.mxu0 0.0
    %416 = vmatprep.subr.mxu0 0.0
    %417 = vmatpush1.msra.mxu0 0.0
    %418 = vmatprep.subr.mxu0 0.0
    %419 = vmatpush1.msra.mxu0 0.0
    %420 = vmatprep.subr.mxu0 0.0
    %421 = vmatpush1.msra.mxu0 0.0
    %422 = vmatprep.subr.mxu0 0.0
    %423 = vmatpush1.msra.mxu0 0.0
    %424 = vmatprep.subr.mxu0 0.0
    %425 = vmatpush1.msra.mxu0 0.0
    %426 = vmatprep.subr.mxu0 0.0
    %427 = vmatpush1.msra.mxu0 0.0
    %428 = vmatprep.subr.mxu0 0.0
    %429 = vmatpush1.msra.mxu0 0.0
    %430 = vmatprep.subr.mxu0 0.0
    %431 = vmatpush1.msra.mxu0 0.0
    %432 = vmatprep.subr.mxu0 0.0
    %433 = vmatpush1.msra.mxu0 0.0
    %434 = vmatprep.subr.mxu0 0.0
    %435 = vmatpush1.msra.mxu0 0.0
    %436 = vmatprep.subr.mxu0 0.0
    %437 = vmatpush1.msra.mxu0 0.0
    %438 = vmatprep.subr.mxu0 0.0
    %439 = vmatpush1.msra.mxu0 0.0
    %440 = vmatprep.subr.mxu0 0.0
    %441 = vmatpush1.msra.mxu0 0.0
    %442 = vmatprep.subr.mxu0 0.0
    %443 = vmatpush1.msra.mxu0 0.0
    %444 = vmatprep.subr.mxu0 0.0
    %445 = vmatpush1.msra.mxu0 0.0
    %446 = vmatprep.subr.mxu0 0.0
    %447 = vmatpush1.msra.mxu0 0.0
    %448 = vmatprep.subr.mxu0 0.0
    %449 = vmatpush1.msra.mxu0 0.0
    %450 = vmatprep.subr.mxu0 0.0
    %451 = vmatpush1.msra.mxu0 0.0
    %452 = vmatprep.mubr.f32.mxu0 0.0
    %453 = vmatmul.mubr.f32.gmra.mrb[0].mxu0 %v67
    %v454 = vpop.f32.mrb[0].mxu0
    %v455 = vadd.f32 0.0, %v454
    %v456 = vpop.f32.mrb[0].mxu0
    %457 = vmatprep.mubr.f32.mxu0 0.0
    %458 = vmatmul.mubr.f32.gmra.mrb[0].mxu0 %v70
    %v459 = vpop.f32.mrb[0].mxu0
    %v460 = vadd.f32 0.0, %v459
    %v461 = vpop.f32.mrb[0].mxu0
    %462 = vdwg.mxu0
    %v463 = vld [vmem:[%s9] sm:$0xff]
    %v464 = vld [vmem:[%s9 + $0x8] sm:$0xff]
    %v465 = vld [vmem:[%s10] sm:$0xff]
    %v466 = vld [vmem:[%s10 + $0x8] sm:$0xff]
    %v467 = vmul.f32 %v139, %v463
    %v468 = vmul.f32 %v144, %v464
    %v469 = vmul.f32 %v376, %v465
    %v470 = vmul.f32 %v381, %v466
    %v471 = vadd.f32 %v467, %v469
    %v472 = vadd.f32 %v468, %v470
    %v473 = vmul.f32 %v218, %v463
    %v474 = vmul.f32 %v223, %v464
    %v475 = vmul.f32 %v455, %v465
    %v476 = vmul.f32 %v460, %v466
    %v477 = vadd.f32 %v473, %v475
    %v478 = vadd.f32 %v474, %v476
    %v479 = vld [vmem:[%s11] sm:$0xff]
    %v480 = vld [vmem:[%s11 + $0x8] sm:$0xff]
    %v481 = vlaneseq
    %v482 = vand.u32 %v481, 127
    %vm483 = vcmp.ge.s32.totalorder %v482, 0
    %vm484 = vcmp.lt.s32.totalorder %v482, 8
    %vm485 = vmand %vm483, %vm484
    %v486 = vsel %vm485, %v471, 0.0
    %v487 = vsel %vm485, %v472, 0.0
    %v489 = vsel %vm46, %v486, 0
    %v492 = vsel %vm46, %v487, 0
    %v495 = vsel %vm46, %v477, 0
    %v498 = vsel %vm46, %v478, 0
    %500 = vmatprep.subr.mxu0 0.0
    %501 = vmatpush1.xpose.msra.mxu0 %v495
    %502 = vmatprep.subr.mxu0 0.0
    %503 = vmatpush1.xpose.msra.mxu0 %v498
    %504 = vmatprep.subr.mxu0 0.0
    %505 = vmatpush1.xpose.msra.mxu0 0.0
    %506 = vmatprep.subr.mxu0 0.0
    %507 = vmatpush1.xpose.msra.mxu0 0.0
    %508 = vmatprep.subr.mxu0 0.0
    %509 = vmatpush1.xpose.msra.mxu0 0.0
    %510 = vmatprep.subr.mxu0 0.0
    %511 = vmatpush1.xpose.msra.mxu0 0.0
    %512 = vmatprep.subr.mxu0 0.0
    %513 = vmatpush1.xpose.msra.mxu0 0.0
    %514 = vmatprep.subr.mxu0 0.0
    %515 = vmatpush1.xpose.msra.mxu0 0.0
    %516 = vmatprep.subr.mxu0 0.0
    %517 = vmatpush1.xpose.msra.mxu0 0.0
    %518 = vmatprep.subr.mxu0 0.0
    %519 = vmatpush1.xpose.msra.mxu0 0.0
    %520 = vmatprep.subr.mxu0 0.0
    %521 = vmatpush1.xpose.msra.mxu0 0.0
    %522 = vmatprep.subr.mxu0 0.0
    %523 = vmatpush1.xpose.msra.mxu0 0.0
    %524 = vmatprep.subr.mxu0 0.0
    %525 = vmatpush1.xpose.msra.mxu0 0.0
    %526 = vmatprep.subr.mxu0 0.0
    %527 = vmatpush1.xpose.msra.mxu0 0.0
    %528 = vmatprep.subr.mxu0 0.0
    %529 = vmatpush1.xpose.msra.mxu0 0.0
    %530 = vmatprep.subr.mxu0 0.0
    %531 = vmatpush1.xpose.msra.mxu0 0.0
    %532 = vmatprep.subr.mxu0 0.0
    %533 = vmatpush1.xpose.msra.mxu0 0.0
    %534 = vmatprep.subr.mxu0 0.0
    %535 = vmatpush1.xpose.msra.mxu0 0.0
    %536 = vmatprep.subr.mxu0 0.0
    %537 = vmatpush1.xpose.msra.mxu0 0.0
    %538 = vmatprep.subr.mxu0 0.0
    %539 = vmatpush1.xpose.msra.mxu0 0.0
    %540 = vmatprep.subr.mxu0 0.0
    %541 = vmatpush1.xpose.msra.mxu0 0.0
    %542 = vmatprep.subr.mxu0 0.0
    %543 = vmatpush1.xpose.msra.mxu0 0.0
    %544 = vmatprep.subr.mxu0 0.0
    %545 = vmatpush1.xpose.msra.mxu0 0.0
    %546 = vmatprep.subr.mxu0 0.0
    %547 = vmatpush1.xpose.msra.mxu0 0.0
    %548 = vmatprep.subr.mxu0 0.0
    %549 = vmatpush1.xpose.msra.mxu0 0.0
    %550 = vmatprep.subr.mxu0 0.0
    %551 = vmatpush1.xpose.msra.mxu0 0.0
    %552 = vmatprep.subr.mxu0 0.0
    %553 = vmatpush1.xpose.msra.mxu0 0.0
    %554 = vmatprep.subr.mxu0 0.0
    %555 = vmatpush1.xpose.msra.mxu0 0.0
    %556 = vmatprep.subr.mxu0 0.0
    %557 = vmatpush1.xpose.msra.mxu0 0.0
    %558 = vmatprep.subr.mxu0 0.0
    %559 = vmatpush1.xpose.msra.mxu0 0.0
    %560 = vmatprep.subr.mxu0 0.0
    %561 = vmatpush1.xpose.msra.mxu0 0.0
    %562 = vmatprep.subr.mxu0 0.0
    %563 = vmatpush1.xpose.msra.mxu0 0.0
    %564 = vmatprep.mubr.f32.mxu0 0.0
    %565 = vmatmul.mubr.f32.gmra.mrb[0].mxu0 %v489
    %v566 = vpop.f32.mrb[0].mxu0
    %v567 = vadd.f32 %v479, %v566
    %v568 = vpop.f32.mrb[0].mxu0
    %569 = vmatprep.mubr.f32.mxu0 0.0
    %570 = vmatmul.mubr.f32.gmra.mrb[0].mxu0 %v492
    %v571 = vpop.f32.mrb[0].mxu0
    %v572 = vadd.f32 %v480, %v571
    %v573 = vpop.f32.mrb[0].mxu0
    %574 = vdwg.mxu0
    %vm575 = vcmask 130048
    %v576 = vsel %vm575, %v567, -inf
    %577 = vmax.xlane.f32.xlu0 %v576
    %v578 = vpop.xlane.xlu0 %577
    %v579 = vsel %vm575, %v572, -inf
    %580 = vmax.xlane.f32.xlu0 %v579
    %v581 = vpop.xlane.xlu0 %580
    %v582 = vsub.f32 %v567, %v578
    %v583 = vsub.f32 %v572, %v581
    %v584 = vmul.f32 %v582, 1.442695
    %v585 = vpow.pop %v584
    %v586 = vmul.f32 %v583, 1.442695
    %v587 = vpow.pop %v586
    %v588 = vsel %vm575, %v585, 0.0
    %589 = vadd.xlane.f32.xlu0 %v588
    %v590 = vpop.xlane.xlu0 %589
    %v591 = vsel %vm575, %v587, 0.0
    %592 = vadd.xlane.f32.xlu0 %v591
    %v593 = vpop.xlane.xlu0 %592
    %v594 = vrcp.pop %v590
    %v595 = vmul.f32 %v585, %v594
    %v596 = vrcp.pop %v593
    %v597 = vmul.f32 %v587, %v596
    %v599 = vsel %vm575, %v595, 0
    %v602 = vsel %vm575, %v597, 0
    %604 = vmatprep.subr.mxu0 0.0
    %605 = vmatpush1.msra.mxu0 %v297
    %606 = vmatprep.subr.mxu0 0.0
    %607 = vmatpush1.msra.mxu0 %v302
    %608 = vmatprep.subr.mxu0 0.0
    %609 = vmatpush1.msra.mxu0 0.0
    %610 = vmatprep.subr.mxu0 0.0
    %611 = vmatpush1.msra.mxu0 0.0
    %612 = vmatprep.subr.mxu0 0.0
    %613 = vmatpush1.msra.mxu0 0.0
    %614 = vmatprep.subr.mxu0 0.0
    %615 = vmatpush1.msra.mxu0 0.0
    %616 = vmatprep.subr.mxu0 0.0
    %617 = vmatpush1.msra.mxu0 0.0
    %618 = vmatprep.subr.mxu0 0.0
    %619 = vmatpush1.msra.mxu0 0.0
    %620 = vmatprep.subr.mxu0 0.0
    %621 = vmatpush1.msra.mxu0 0.0
    %622 = vmatprep.subr.mxu0 0.0
    %623 = vmatpush1.msra.mxu0 0.0
    %624 = vmatprep.subr.mxu0 0.0
    %625 = vmatpush1.msra.mxu0 0.0
    %626 = vmatprep.subr.mxu0 0.0
    %627 = vmatpush1.msra.mxu0 0.0
    %628 = vmatprep.subr.mxu0 0.0
    %629 = vmatpush1.msra.mxu0 0.0
    %630 = vmatprep.subr.mxu0 0.0
    %631 = vmatpush1.msra.mxu0 0.0
    %632 = vmatprep.subr.mxu0 0.0
    %633 = vmatpush1.msra.mxu0 0.0
    %634 = vmatprep.subr.mxu0 0.0
    %635 = vmatpush1.msra.mxu0 0.0
    %636 = vmatprep.subr.mxu0 0.0
    %637 = vmatpush1.msra.mxu0 0.0
    %638 = vmatprep.subr.mxu0 0.0
    %639 = vmatpush1.msra.mxu0 0.0
    %640 = vmatprep.subr.mxu0 0.0
    %641 = vmatpush1.msra.mxu0 0.0
    %642 = vmatprep.subr.mxu0 0.0
    %643 = vmatpush1.msra.mxu0 0.0
    %644 = vmatprep.subr.mxu0 0.0
    %645 = vmatpush1.msra.mxu0 0.0
    %646 = vmatprep.subr.mxu0 0.0
    %647 = vmatpush1.msra.mxu0 0.0
    %648 = vmatprep.subr.mxu0 0.0
    %649 = vmatpush1.msra.mxu0 0.0
    %650 = vmatprep.subr.mxu0 0.0
    %651 = vmatpush1.msra.mxu0 0.0
    %652 = vmatprep.subr.mxu0 0.0
    %653 = vmatpush1.msra.mxu0 0.0
    %654 = vmatprep.subr.mxu0 0.0
    %655 = vmatpush1.msra.mxu0 0.0
    %656 = vmatprep.subr.mxu0 0.0
    %657 = vmatpush1.msra.mxu0 0.0
    %658 = vmatprep.subr.mxu0 0.0
    %659 = vmatpush1.msra.mxu0 0.0
    %660 = vmatprep.subr.mxu0 0.0
    %661 = vmatpush1.msra.mxu0 0.0
    %662 = vmatprep.subr.mxu0 0.0
    %663 = vmatpush1.msra.mxu0 0.0
    %664 = vmatprep.subr.mxu0 0.0
    %665 = vmatpush1.msra.mxu0 0.0
    %666 = vmatprep.subr.mxu0 0.0
    %667 = vmatpush1.msra.mxu0 0.0
    %668 = vmatprep.mubr.f32.mxu0 0.0
    %669 = vmatmul.mubr.f32.gmra.mrb[0].mxu0 %v599
    %v670 = vpop.f32.mrb[0].mxu0
    %v671 = vadd.f32 0.0, %v670
    %v672 = vpop.f32.mrb[0].mxu0
    %673 = vmatprep.mubr.f32.mxu0 0.0
    %674 = vmatmul.mubr.f32.gmra.mrb[0].mxu0 %v602
    %v675 = vpop.f32.mrb[0].mxu0
    %v676 = vadd.f32 0.0, %v675
    %v677 = vpop.f32.mrb[0].mxu0
    %678 = vdwg.mxu0
    %v679 = vsel %vm485, %v671, 0.0
    %v680 = vsel %vm485, %v676, 0.0
    %v681 = vadd.f32 %v679, 0.0
    %v682 = vadd.f32 %v680, 0.0
    %vm683 = vcmp.ge.s32.totalorder %v482, 8
    %vm684 = vcmp.lt.s32.totalorder %v482, 16
    %vm685 = vmand %vm683, %vm684
    %v686 = vsel %vm685, %v471, 0.0
    %v687 = vsel %vm685, %v472, 0.0
    %v689 = vsel %vm46, %v686, 0
    %v692 = vsel %vm46, %v687, 0
    %694 = vmatprep.subr.mxu0 0.0
    %695 = vmatpush1.xpose.msra.mxu0 %v495
    %696 = vmatprep.subr.mxu0 0.0
    %697 = vmatpush1.xpose.msra.mxu0 %v498
    %698 = vmatprep.subr.mxu0 0.0
    %699 = vmatpush1.xpose.msra.mxu0 0.0
    %700 = vmatprep.subr.mxu0 0.0
    %701 = vmatpush1.xpose.msra.mxu0 0.0
    %702 = vmatprep.subr.mxu0 0.0
    %703 = vmatpush1.xpose.msra.mxu0 0.0
    %704 = vmatprep.subr.mxu0 0.0
    %705 = vmatpush1.xpose.msra.mxu0 0.0
    %706 = vmatprep.subr.mxu0 0.0
    %707 = vmatpush1.xpose.msra.mxu0 0.0
    %708 = vmatprep.subr.mxu0 0.0
    %709 = vmatpush1.xpose.msra.mxu0 0.0
    %710 = vmatprep.subr.mxu0 0.0
    %711 = vmatpush1.xpose.msra.mxu0 0.0
    %712 = vmatprep.subr.mxu0 0.0
    %713 = vmatpush1.xpose.msra.mxu0 0.0
    %714 = vmatprep.subr.mxu0 0.0
    %715 = vmatpush1.xpose.msra.mxu0 0.0
    %716 = vmatprep.subr.mxu0 0.0
    %717 = vmatpush1.xpose.msra.mxu0 0.0
    %718 = vmatprep.subr.mxu0 0.0
    %719 = vmatpush1.xpose.msra.mxu0 0.0
    %720 = vmatprep.subr.mxu0 0.0
    %721 = vmatpush1.xpose.msra.mxu0 0.0
    %722 = vmatprep.subr.mxu0 0.0
    %723 = vmatpush1.xpose.msra.mxu0 0.0
    %724 = vmatprep.subr.mxu0 0.0
    %725 = vmatpush1.xpose.msra.mxu0 0.0
    %726 = vmatprep.subr.mxu0 0.0
    %727 = vmatpush1.xpose.msra.mxu0 0.0
    %728 = vmatprep.subr.mxu0 0.0
    %729 = vmatpush1.xpose.msra.mxu0 0.0
    %730 = vmatprep.subr.mxu0 0.0
    %731 = vmatpush1.xpose.msra.mxu0 0.0
    %732 = vmatprep.subr.mxu0 0.0
    %733 = vmatpush1.xpose.msra.mxu0 0.0
    %734 = vmatprep.subr.mxu0 0.0
    %735 = vmatpush1.xpose.msra.mxu0 0.0
    %736 = vmatprep.subr.mxu0 0.0
    %737 = vmatpush1.xpose.msra.mxu0 0.0
    %738 = vmatprep.subr.mxu0 0.0
    %739 = vmatpush1.xpose.msra.mxu0 0.0
    %740 = vmatprep.subr.mxu0 0.0
    %741 = vmatpush1.xpose.msra.mxu0 0.0
    %742 = vmatprep.subr.mxu0 0.0
    %743 = vmatpush1.xpose.msra.mxu0 0.0
    %744 = vmatprep.subr.mxu0 0.0
    %745 = vmatpush1.xpose.msra.mxu0 0.0
    %746 = vmatprep.subr.mxu0 0.0
    %747 = vmatpush1.xpose.msra.mxu0 0.0
    %748 = vmatprep.subr.mxu0 0.0
    %749 = vmatpush1.xpose.msra.mxu0 0.0
    %750 = vmatprep.subr.mxu0 0.0
    %751 = vmatpush1.xpose.msra.mxu0 0.0
    %752 = vmatprep.subr.mxu0 0.0
    %753 = vmatpush1.xpose.msra.mxu0 0.0
    %754 = vmatprep.subr.mxu0 0.0
    %755 = vmatpush1.xpose.msra.mxu0 0.0
    %756 = vmatprep.subr.mxu0 0.0
    %757 = vmatpush1.xpose.msra.mxu0 0.0
    %758 = vmatprep.mubr.f32.mxu0 0.0
    %759 = vmatmul.mubr.f32.gmra.mrb[0].mxu0 %v689
    %v760 = vpop.f32.mrb[0].mxu0
    %v761 = vadd.f32 %v479, %v760
    %v762 = vpop.f32.mrb[0].mxu0
    %763 = vmatprep.mubr.f32.mxu0 0.0
    %764 = vmatmul.mubr.f32.gmra.mrb[0].mxu0 %v692
    %v765 = vpop.f32.mrb[0].mxu0
    %v766 = vadd.f32 %v480, %v765
    %v767 = vpop.f32.mrb[0].mxu0
    %768 = vdwg.mxu0
    %v769 = vsel %vm575, %v761, -inf
    %770 = vmax.xlane.f32.xlu0 %v769
    %v771 = vpop.xlane.xlu0 %770
    %v772 = vsel %vm575, %v766, -inf
    %773 = vmax.xlane.f32.xlu0 %v772
    %v774 = vpop.xlane.xlu0 %773
    %v775 = vsub.f32 %v761, %v771
    %v776 = vsub.f32 %v766, %v774
    %v777 = vmul.f32 %v775, 1.442695
    %v778 = vpow.pop %v777
    %v779 = vmul.f32 %v776, 1.442695
    %v780 = vpow.pop %v779
    %v781 = vsel %vm575, %v778, 0.0
    %782 = vadd.xlane.f32.xlu0 %v781
    %v783 = vpop.xlane.xlu0 %782
    %v784 = vsel %vm575, %v780, 0.0
    %785 = vadd.xlane.f32.xlu0 %v784
    %v786 = vpop.xlane.xlu0 %785
    %v787 = vrcp.pop %v783
    %v788 = vmul.f32 %v778, %v787
    %v789 = vrcp.pop %v786
    %v790 = vmul.f32 %v780, %v789
    %v792 = vsel %vm575, %v788, 0
    %v795 = vsel %vm575, %v790, 0
    %797 = vmatprep.subr.mxu0 0.0
    %798 = vmatpush1.msra.mxu0 %v297
    %799 = vmatprep.subr.mxu0 0.0
    %800 = vmatpush1.msra.mxu0 %v302
    %801 = vmatprep.subr.mxu0 0.0
    %802 = vmatpush1.msra.mxu0 0.0
    %803 = vmatprep.subr.mxu0 0.0
    %804 = vmatpush1.msra.mxu0 0.0
    %805 = vmatprep.subr.mxu0 0.0
    %806 = vmatpush1.msra.mxu0 0.0
    %807 = vmatprep.subr.mxu0 0.0
    %808 = vmatpush1.msra.mxu0 0.0
    %809 = vmatprep.subr.mxu0 0.0
    %810 = vmatpush1.msra.mxu0 0.0
    %811 = vmatprep.subr.mxu0 0.0
    %812 = vmatpush1.msra.mxu0 0.0
    %813 = vmatprep.subr.mxu0 0.0
    %814 = vmatpush1.msra.mxu0 0.0
    %815 = vmatprep.subr.mxu0 0.0
    %816 = vmatpush1.msra.mxu0 0.0
    %817 = vmatprep.subr.mxu0 0.0
    %818 = vmatpush1.msra.mxu0 0.0
    %819 = vmatprep.subr.mxu0 0.0
    %820 = vmatpush1.msra.mxu0 0.0
    %821 = vmatprep.subr.mxu0 0.0
    %822 = vmatpush1.msra.mxu0 0.0
    %823 = vmatprep.subr.mxu0 0.0
    %824 = vmatpush1.msra.mxu0 0.0
    %825 = vmatprep.subr.mxu0 0.0
    %826 = vmatpush1.msra.mxu0 0.0
    %827 = vmatprep.subr.mxu0 0.0
    %828 = vmatpush1.msra.mxu0 0.0
    %829 = vmatprep.subr.mxu0 0.0
    %830 = vmatpush1.msra.mxu0 0.0
    %831 = vmatprep.subr.mxu0 0.0
    %832 = vmatpush1.msra.mxu0 0.0
    %833 = vmatprep.subr.mxu0 0.0
    %834 = vmatpush1.msra.mxu0 0.0
    %835 = vmatprep.subr.mxu0 0.0
    %836 = vmatpush1.msra.mxu0 0.0
    %837 = vmatprep.subr.mxu0 0.0
    %838 = vmatpush1.msra.mxu0 0.0
    %839 = vmatprep.subr.mxu0 0.0
    %840 = vmatpush1.msra.mxu0 0.0
    %841 = vmatprep.subr.mxu0 0.0
    %842 = vmatpush1.msra.mxu0 0.0
    %843 = vmatprep.subr.mxu0 0.0
    %844 = vmatpush1.msra.mxu0 0.0
    %845 = vmatprep.subr.mxu0 0.0
    %846 = vmatpush1.msra.mxu0 0.0
    %847 = vmatprep.subr.mxu0 0.0
    %848 = vmatpush1.msra.mxu0 0.0
    %849 = vmatprep.subr.mxu0 0.0
    %850 = vmatpush1.msra.mxu0 0.0
    %851 = vmatprep.subr.mxu0 0.0
    %852 = vmatpush1.msra.mxu0 0.0
    %853 = vmatprep.subr.mxu0 0.0
    %854 = vmatpush1.msra.mxu0 0.0
    %855 = vmatprep.subr.mxu0 0.0
    %856 = vmatpush1.msra.mxu0 0.0
    %857 = vmatprep.subr.mxu0 0.0
    %858 = vmatpush1.msra.mxu0 0.0
    %859 = vmatprep.subr.mxu0 0.0
    %860 = vmatpush1.msra.mxu0 0.0
    %861 = vmatprep.mubr.f32.mxu0 0.0
    %862 = vmatmul.mubr.f32.gmra.mrb[0].mxu0 %v792
    %v863 = vpop.f32.mrb[0].mxu0
    %v864 = vadd.f32 0.0, %v863
    %v865 = vpop.f32.mrb[0].mxu0
    %866 = vmatprep.mubr.f32.mxu0 0.0
    %867 = vmatmul.mubr.f32.gmra.mrb[0].mxu0 %v795
    %v868 = vpop.f32.mrb[0].mxu0
    %v869 = vadd.f32 0.0, %v868
    %v870 = vpop.f32.mrb[0].mxu0
    %871 = vdwg.mxu0
    %v872 = vsel %vm685, %v864, 0.0
    %v873 = vsel %vm685, %v869, 0.0
    %v874 = vadd.f32 %v681, %v872
    %v875 = vadd.f32 %v682, %v873
    %vm876 = vcmp.ge.s32.totalorder %v482, 16
    %vm877 = vcmp.lt.s32.totalorder %v482, 24
    %vm878 = vmand %vm876, %vm877
    %v879 = vsel %vm878, %v471, 0.0
    %v880 = vsel %vm878, %v472, 0.0
    %v882 = vsel %vm46, %v879, 0
    %v885 = vsel %vm46, %v880, 0
    %887 = vmatprep.subr.mxu0 0.0
    %888 = vmatpush1.xpose.msra.mxu0 %v495
    %889 = vmatprep.subr.mxu0 0.0
    %890 = vmatpush1.xpose.msra.mxu0 %v498
    %891 = vmatprep.subr.mxu0 0.0
    %892 = vmatpush1.xpose.msra.mxu0 0.0
    %893 = vmatprep.subr.mxu0 0.0
    %894 = vmatpush1.xpose.msra.mxu0 0.0
    %895 = vmatprep.subr.mxu0 0.0
    %896 = vmatpush1.xpose.msra.mxu0 0.0
    %897 = vmatprep.subr.mxu0 0.0
    %898 = vmatpush1.xpose.msra.mxu0 0.0
    %899 = vmatprep.subr.mxu0 0.0
    %900 = vmatpush1.xpose.msra.mxu0 0.0
    %901 = vmatprep.subr.mxu0 0.0
    %902 = vmatpush1.xpose.msra.mxu0 0.0
    %903 = vmatprep.subr.mxu0 0.0
    %904 = vmatpush1.xpose.msra.mxu0 0.0
    %905 = vmatprep.subr.mxu0 0.0
    %906 = vmatpush1.xpose.msra.mxu0 0.0
    %907 = vmatprep.subr.mxu0 0.0
    %908 = vmatpush1.xpose.msra.mxu0 0.0
    %909 = vmatprep.subr.mxu0 0.0
    %910 = vmatpush1.xpose.msra.mxu0 0.0
    %911 = vmatprep.subr.mxu0 0.0
    %912 = vmatpush1.xpose.msra.mxu0 0.0
    %913 = vmatprep.subr.mxu0 0.0
    %914 = vmatpush1.xpose.msra.mxu0 0.0
    %915 = vmatprep.subr.mxu0 0.0
    %916 = vmatpush1.xpose.msra.mxu0 0.0
    %917 = vmatprep.subr.mxu0 0.0
    %918 = vmatpush1.xpose.msra.mxu0 0.0
    %919 = vmatprep.subr.mxu0 0.0
    %920 = vmatpush1.xpose.msra.mxu0 0.0
    %921 = vmatprep.subr.mxu0 0.0
    %922 = vmatpush1.xpose.msra.mxu0 0.0
    %923 = vmatprep.subr.mxu0 0.0
    %924 = vmatpush1.xpose.msra.mxu0 0.0
    %925 = vmatprep.subr.mxu0 0.0
    %926 = vmatpush1.xpose.msra.mxu0 0.0
    %927 = vmatprep.subr.mxu0 0.0
    %928 = vmatpush1.xpose.msra.mxu0 0.0
    %929 = vmatprep.subr.mxu0 0.0
    %930 = vmatpush1.xpose.msra.mxu0 0.0
    %931 = vmatprep.subr.mxu0 0.0
    %932 = vmatpush1.xpose.msra.mxu0 0.0
    %933 = vmatprep.subr.mxu0 0.0
    %934 = vmatpush1.xpose.msra.mxu0 0.0
    %935 = vmatprep.subr.mxu0 0.0
    %936 = vmatpush1.xpose.msra.mxu0 0.0
    %937 = vmatprep.subr.mxu0 0.0
    %938 = vmatpush1.xpose.msra.mxu0 0.0
    %939 = vmatprep.subr.mxu0 0.0
    %940 = vmatpush1.xpose.msra.mxu0 0.0
    %941 = vmatprep.subr.mxu0 0.0
    %942 = vmatpush1.xpose.msra.mxu0 0.0
    %943 = vmatprep.subr.mxu0 0.0
    %944 = vmatpush1.xpose.msra.mxu0 0.0
    %945 = vmatprep.subr.mxu0 0.0
    %946 = vmatpush1.xpose.msra.mxu0 0.0
    %947 = vmatprep.subr.mxu0 0.0
    %948 = vmatpush1.xpose.msra.mxu0 0.0
    %949 = vmatprep.subr.mxu0 0.0
    %950 = vmatpush1.xpose.msra.mxu0 0.0
    %951 = vmatprep.mubr.f32.mxu0 0.0
    %952 = vmatmul.mubr.f32.gmra.mrb[0].mxu0 %v882
    %v953 = vpop.f32.mrb[0].mxu0
    %v954 = vadd.f32 %v479, %v953
    %v955 = vpop.f32.mrb[0].mxu0
    %956 = vmatprep.mubr.f32.mxu0 0.0
    %957 = vmatmul.mubr.f32.gmra.mrb[0].mxu0 %v885
    %v958 = vpop.f32.mrb[0].mxu0
    %v959 = vadd.f32 %v480, %v958
    %v960 = vpop.f32.mrb[0].mxu0
    %961 = vdwg.mxu0
    %v962 = vsel %vm575, %v954, -inf
    %963 = vmax.xlane.f32.xlu0 %v962
    %v964 = vpop.xlane.xlu0 %963
    %v965 = vsel %vm575, %v959, -inf
    %966 = vmax.xlane.f32.xlu0 %v965
    %v967 = vpop.xlane.xlu0 %966
    %v968 = vsub.f32 %v954, %v964
    %v969 = vsub.f32 %v959, %v967
    %v970 = vmul.f32 %v968, 1.442695
    %v971 = vpow.pop %v970
    %v972 = vmul.f32 %v969, 1.442695
    %v973 = vpow.pop %v972
    %v974 = vsel %vm575, %v971, 0.0
    %975 = vadd.xlane.f32.xlu0 %v974
    %v976 = vpop.xlane.xlu0 %975
    %v977 = vsel %vm575, %v973, 0.0
    %978 = vadd.xlane.f32.xlu0 %v977
    %v979 = vpop.xlane.xlu0 %978
    %v980 = vrcp.pop %v976
    %v981 = vmul.f32 %v971, %v980
    %v982 = vrcp.pop %v979
    %v983 = vmul.f32 %v973, %v982
    %v985 = vsel %vm575, %v981, 0
    %v988 = vsel %vm575, %v983, 0
    %990 = vmatprep.subr.mxu0 0.0
    %991 = vmatpush1.msra.mxu0 %v297
    %992 = vmatprep.subr.mxu0 0.0
    %993 = vmatpush1.msra.mxu0 %v302
    %994 = vmatprep.subr.mxu0 0.0
    %995 = vmatpush1.msra.mxu0 0.0
    %996 = vmatprep.subr.mxu0 0.0
    %997 = vmatpush1.msra.mxu0 0.0
    %998 = vmatprep.subr.mxu0 0.0
    %999 = vmatpush1.msra.mxu0 0.0
    %1000 = vmatprep.subr.mxu0 0.0
    %1001 = vmatpush1.msra.mxu0 0.0
    %1002 = vmatprep.subr.mxu0 0.0
    %1003 = vmatpush1.msra.mxu0 0.0
    %1004 = vmatprep.subr.mxu0 0.0
    %1005 = vmatpush1.msra.mxu0 0.0
    %1006 = vmatprep.subr.mxu0 0.0
    %1007 = vmatpush1.msra.mxu0 0.0
    %1008 = vmatprep.subr.mxu0 0.0
    %1009 = vmatpush1.msra.mxu0 0.0
    %1010 = vmatprep.subr.mxu0 0.0
    %1011 = vmatpush1.msra.mxu0 0.0
    %1012 = vmatprep.subr.mxu0 0.0
    %1013 = vmatpush1.msra.mxu0 0.0
    %1014 = vmatprep.subr.mxu0 0.0
    %1015 = vmatpush1.msra.mxu0 0.0
    %1016 = vmatprep.subr.mxu0 0.0
    %1017 = vmatpush1.msra.mxu0 0.0
    %1018 = vmatprep.subr.mxu0 0.0
    %1019 = vmatpush1.msra.mxu0 0.0
    %1020 = vmatprep.subr.mxu0 0.0
    %1021 = vmatpush1.msra.mxu0 0.0
    %1022 = vmatprep.subr.mxu0 0.0
    %1023 = vmatpush1.msra.mxu0 0.0
    %1024 = vmatprep.subr.mxu0 0.0
    %1025 = vmatpush1.msra.mxu0 0.0
    %1026 = vmatprep.subr.mxu0 0.0
    %1027 = vmatpush1.msra.mxu0 0.0
    %1028 = vmatprep.subr.mxu0 0.0
    %1029 = vmatpush1.msra.mxu0 0.0
    %1030 = vmatprep.subr.mxu0 0.0
    %1031 = vmatpush1.msra.mxu0 0.0
    %1032 = vmatprep.subr.mxu0 0.0
    %1033 = vmatpush1.msra.mxu0 0.0
    %1034 = vmatprep.subr.mxu0 0.0
    %1035 = vmatpush1.msra.mxu0 0.0
    %1036 = vmatprep.subr.mxu0 0.0
    %1037 = vmatpush1.msra.mxu0 0.0
    %1038 = vmatprep.subr.mxu0 0.0
    %1039 = vmatpush1.msra.mxu0 0.0
    %1040 = vmatprep.subr.mxu0 0.0
    %1041 = vmatpush1.msra.mxu0 0.0
    %1042 = vmatprep.subr.mxu0 0.0
    %1043 = vmatpush1.msra.mxu0 0.0
    %1044 = vmatprep.subr.mxu0 0.0
    %1045 = vmatpush1.msra.mxu0 0.0
    %1046 = vmatprep.subr.mxu0 0.0
    %1047 = vmatpush1.msra.mxu0 0.0
    %1048 = vmatprep.subr.mxu0 0.0
    %1049 = vmatpush1.msra.mxu0 0.0
    %1050 = vmatprep.subr.mxu0 0.0
    %1051 = vmatpush1.msra.mxu0 0.0
    %1052 = vmatprep.subr.mxu0 0.0
    %1053 = vmatpush1.msra.mxu0 0.0
    %1054 = vmatprep.mubr.f32.mxu0 0.0
    %1055 = vmatmul.mubr.f32.gmra.mrb[0].mxu0 %v985
    %v1056 = vpop.f32.mrb[0].mxu0
    %v1057 = vadd.f32 0.0, %v1056
    %v1058 = vpop.f32.mrb[0].mxu0
    %1059 = vmatprep.mubr.f32.mxu0 0.0
    %1060 = vmatmul.mubr.f32.gmra.mrb[0].mxu0 %v988
    %v1061 = vpop.f32.mrb[0].mxu0
    %v1062 = vadd.f32 0.0, %v1061
    %v1063 = vpop.f32.mrb[0].mxu0
    %1064 = vdwg.mxu0
    %v1065 = vsel %vm878, %v1057, 0.0
    %v1066 = vsel %vm878, %v1062, 0.0
    %v1067 = vadd.f32 %v874, %v1065
    %v1068 = vadd.f32 %v875, %v1066
    %vm1069 = vcmp.ge.s32.totalorder %v482, 24
    %vm1070 = vcmp.lt.s32.totalorder %v482, 32
    %vm1071 = vmand %vm1069, %vm1070
    %v1072 = vsel %vm1071, %v471, 0.0
    %v1073 = vsel %vm1071, %v472, 0.0
    %v1075 = vsel %vm46, %v1072, 0
    %v1078 = vsel %vm46, %v1073, 0
    %1080 = vmatprep.subr.mxu0 0.0
    %1081 = vmatpush1.xpose.msra.mxu0 %v495
    %1082 = vmatprep.subr.mxu0 0.0
    %1083 = vmatpush1.xpose.msra.mxu0 %v498
    %1084 = vmatprep.subr.mxu0 0.0
    %1085 = vmatpush1.xpose.msra.mxu0 0.0
    %1086 = vmatprep.subr.mxu0 0.0
    %1087 = vmatpush1.xpose.msra.mxu0 0.0
    %1088 = vmatprep.subr.mxu0 0.0
    %1089 = vmatpush1.xpose.msra.mxu0 0.0
    %1090 = vmatprep.subr.mxu0 0.0
    %1091 = vmatpush1.xpose.msra.mxu0 0.0
    %1092 = vmatprep.subr.mxu0 0.0
    %1093 = vmatpush1.xpose.msra.mxu0 0.0
    %1094 = vmatprep.subr.mxu0 0.0
    %1095 = vmatpush1.xpose.msra.mxu0 0.0
    %1096 = vmatprep.subr.mxu0 0.0
    %1097 = vmatpush1.xpose.msra.mxu0 0.0
    %1098 = vmatprep.subr.mxu0 0.0
    %1099 = vmatpush1.xpose.msra.mxu0 0.0
    %1100 = vmatprep.subr.mxu0 0.0
    %1101 = vmatpush1.xpose.msra.mxu0 0.0
    %1102 = vmatprep.subr.mxu0 0.0
    %1103 = vmatpush1.xpose.msra.mxu0 0.0
    %1104 = vmatprep.subr.mxu0 0.0
    %1105 = vmatpush1.xpose.msra.mxu0 0.0
    %1106 = vmatprep.subr.mxu0 0.0
    %1107 = vmatpush1.xpose.msra.mxu0 0.0
    %1108 = vmatprep.subr.mxu0 0.0
    %1109 = vmatpush1.xpose.msra.mxu0 0.0
    %1110 = vmatprep.subr.mxu0 0.0
    %1111 = vmatpush1.xpose.msra.mxu0 0.0
    %1112 = vmatprep.subr.mxu0 0.0
    %1113 = vmatpush1.xpose.msra.mxu0 0.0
    %1114 = vmatprep.subr.mxu0 0.0
    %1115 = vmatpush1.xpose.msra.mxu0 0.0
    %1116 = vmatprep.subr.mxu0 0.0
    %1117 = vmatpush1.xpose.msra.mxu0 0.0
    %1118 = vmatprep.subr.mxu0 0.0
    %1119 = vmatpush1.xpose.msra.mxu0 0.0
    %1120 = vmatprep.subr.mxu0 0.0
    %1121 = vmatpush1.xpose.msra.mxu0 0.0
    %1122 = vmatprep.subr.mxu0 0.0
    %1123 = vmatpush1.xpose.msra.mxu0 0.0
    %1124 = vmatprep.subr.mxu0 0.0
    %1125 = vmatpush1.xpose.msra.mxu0 0.0
    %1126 = vmatprep.subr.mxu0 0.0
    %1127 = vmatpush1.xpose.msra.mxu0 0.0
    %1128 = vmatprep.subr.mxu0 0.0
    %1129 = vmatpush1.xpose.msra.mxu0 0.0
    %1130 = vmatprep.subr.mxu0 0.0
    %1131 = vmatpush1.xpose.msra.mxu0 0.0
    %1132 = vmatprep.subr.mxu0 0.0
    %1133 = vmatpush1.xpose.msra.mxu0 0.0
    %1134 = vmatprep.subr.mxu0 0.0
    %1135 = vmatpush1.xpose.msra.mxu0 0.0
    %1136 = vmatprep.subr.mxu0 0.0
    %1137 = vmatpush1.xpose.msra.mxu0 0.0
    %1138 = vmatprep.subr.mxu0 0.0
    %1139 = vmatpush1.xpose.msra.mxu0 0.0
    %1140 = vmatprep.subr.mxu0 0.0
    %1141 = vmatpush1.xpose.msra.mxu0 0.0
    %1142 = vmatprep.subr.mxu0 0.0
    %1143 = vmatpush1.xpose.msra.mxu0 0.0
    %1144 = vmatprep.mubr.f32.mxu0 0.0
    %1145 = vmatmul.mubr.f32.gmra.mrb[0].mxu0 %v1075
    %v1146 = vpop.f32.mrb[0].mxu0
    %v1147 = vadd.f32 %v479, %v1146
    %v1148 = vpop.f32.mrb[0].mxu0
    %1149 = vmatprep.mubr.f32.mxu0 0.0
    %1150 = vmatmul.mubr.f32.gmra.mrb[0].mxu0 %v1078
    %v1151 = vpop.f32.mrb[0].mxu0
    %v1152 = vadd.f32 %v480, %v1151
    %v1153 = vpop.f32.mrb[0].mxu0
    %1154 = vdwg.mxu0
    %v1155 = vsel %vm575, %v1147, -inf
    %1156 = vmax.xlane.f32.xlu0 %v1155
    %v1157 = vpop.xlane.xlu0 %1156
    %v1158 = vsel %vm575, %v1152, -inf
    %1159 = vmax.xlane.f32.xlu0 %v1158
    %v1160 = vpop.xlane.xlu0 %1159
    %v1161 = vsub.f32 %v1147, %v1157
    %v1162 = vsub.f32 %v1152, %v1160
    %v1163 = vmul.f32 %v1161, 1.442695
    %v1164 = vpow.pop %v1163
    %v1165 = vmul.f32 %v1162, 1.442695
    %v1166 = vpow.pop %v1165
    %v1167 = vsel %vm575, %v1164, 0.0
    %1168 = vadd.xlane.f32.xlu0 %v1167
    %v1169 = vpop.xlane.xlu0 %1168
    %v1170 = vsel %vm575, %v1166, 0.0
    %1171 = vadd.xlane.f32.xlu0 %v1170
    %v1172 = vpop.xlane.xlu0 %1171
    %v1173 = vrcp.pop %v1169
    %v1174 = vmul.f32 %v1164, %v1173
    %v1175 = vrcp.pop %v1172
    %v1176 = vmul.f32 %v1166, %v1175
    %v1178 = vsel %vm575, %v1174, 0
    %v1181 = vsel %vm575, %v1176, 0
    %1183 = vmatprep.subr.mxu0 0.0
    %1184 = vmatpush1.msra.mxu0 %v297
    %1185 = vmatprep.subr.mxu0 0.0
    %1186 = vmatpush1.msra.mxu0 %v302
    %1187 = vmatprep.subr.mxu0 0.0
    %1188 = vmatpush1.msra.mxu0 0.0
    %1189 = vmatprep.subr.mxu0 0.0
    %1190 = vmatpush1.msra.mxu0 0.0
    %1191 = vmatprep.subr.mxu0 0.0
    %1192 = vmatpush1.msra.mxu0 0.0
    %1193 = vmatprep.subr.mxu0 0.0
    %1194 = vmatpush1.msra.mxu0 0.0
    %1195 = vmatprep.subr.mxu0 0.0
    %1196 = vmatpush1.msra.mxu0 0.0
    %1197 = vmatprep.subr.mxu0 0.0
    %1198 = vmatpush1.msra.mxu0 0.0
    %1199 = vmatprep.subr.mxu0 0.0
    %1200 = vmatpush1.msra.mxu0 0.0
    %1201 = vmatprep.subr.mxu0 0.0
    %1202 = vmatpush1.msra.mxu0 0.0
    %1203 = vmatprep.subr.mxu0 0.0
    %1204 = vmatpush1.msra.mxu0 0.0
    %1205 = vmatprep.subr.mxu0 0.0
    %1206 = vmatpush1.msra.mxu0 0.0
    %1207 = vmatprep.subr.mxu0 0.0
    %1208 = vmatpush1.msra.mxu0 0.0
    %1209 = vmatprep.subr.mxu0 0.0
    %1210 = vmatpush1.msra.mxu0 0.0
    %1211 = vmatprep.subr.mxu0 0.0
    %1212 = vmatpush1.msra.mxu0 0.0
    %1213 = vmatprep.subr.mxu0 0.0
    %1214 = vmatpush1.msra.mxu0 0.0
    %1215 = vmatprep.subr.mxu0 0.0
    %1216 = vmatpush1.msra.mxu0 0.0
    %1217 = vmatprep.subr.mxu0 0.0
    %1218 = vmatpush1.msra.mxu0 0.0
    %1219 = vmatprep.subr.mxu0 0.0
    %1220 = vmatpush1.msra.mxu0 0.0
    %1221 = vmatprep.subr.mxu0 0.0
    %1222 = vmatpush1.msra.mxu0 0.0
    %1223 = vmatprep.subr.mxu0 0.0
    %1224 = vmatpush1.msra.mxu0 0.0
    %1225 = vmatprep.subr.mxu0 0.0
    %1226 = vmatpush1.msra.mxu0 0.0
    %1227 = vmatprep.subr.mxu0 0.0
    %1228 = vmatpush1.msra.mxu0 0.0
    %1229 = vmatprep.subr.mxu0 0.0
    %1230 = vmatpush1.msra.mxu0 0.0
    %1231 = vmatprep.subr.mxu0 0.0
    %1232 = vmatpush1.msra.mxu0 0.0
    %1233 = vmatprep.subr.mxu0 0.0
    %1234 = vmatpush1.msra.mxu0 0.0
    %1235 = vmatprep.subr.mxu0 0.0
    %1236 = vmatpush1.msra.mxu0 0.0
    %1237 = vmatprep.subr.mxu0 0.0
    %1238 = vmatpush1.msra.mxu0 0.0
    %1239 = vmatprep.subr.mxu0 0.0
    %1240 = vmatpush1.msra.mxu0 0.0
    %1241 = vmatprep.subr.mxu0 0.0
    %1242 = vmatpush1.msra.mxu0 0.0
    %1243 = vmatprep.subr.mxu0 0.0
    %1244 = vmatpush1.msra.mxu0 0.0
    %1245 = vmatprep.subr.mxu0 0.0
    %1246 = vmatpush1.msra.mxu0 0.0
    %1247 = vmatprep.mubr.f32.mxu0 0.0
    %1248 = vmatmul.mubr.f32.gmra.mrb[0].mxu0 %v1178
    %v1249 = vpop.f32.mrb[0].mxu0
    %v1250 = vadd.f32 0.0, %v1249
    %v1251 = vpop.f32.mrb[0].mxu0
    %1252 = vmatprep.mubr.f32.mxu0 0.0
    %1253 = vmatmul.mubr.f32.gmra.mrb[0].mxu0 %v1181
    %v1254 = vpop.f32.mrb[0].mxu0
    %v1255 = vadd.f32 0.0, %v1254
    %v1256 = vpop.f32.mrb[0].mxu0
    %1257 = vdwg.mxu0
    %v1258 = vsel %vm1071, %v1250, 0.0
    %v1259 = vsel %vm1071, %v1255, 0.0
    %v1260 = vadd.f32 %v1067, %v1258
    %v1261 = vadd.f32 %v1068, %v1259
    %v1262 = vld [vmem:[%s6] sm:$0xff]
    %v1263 = vld [vmem:[%s6 + $0x8] sm:$0xff]
    %v1264 = vld [vmem:[%s6 + $0x10] sm:$0xff]
    %v1265 = vld [vmem:[%s6 + $0x18] sm:$0xff]
    %v1267 = vsel %vm46, %v1260, 0
    %v1270 = vsel %vm46, %v1261, 0
    %1272 = vmatprep.subr.mxu0 0.0
    %1273 = vmatpush1.msra.mxu0 %v1262
    %1274 = vmatprep.subr.mxu0 0.0
    %1275 = vmatpush1.msra.mxu0 %v1263
    %1276 = vmatprep.subr.mxu0 0.0
    %1277 = vmatpush1.msra.mxu0 %v1264
    %1278 = vmatprep.subr.mxu0 0.0
    %1279 = vmatpush1.msra.mxu0 %v1265
    %1280 = vmatprep.subr.mxu0 0.0
    %1281 = vmatpush1.msra.mxu0 0.0
    %1282 = vmatprep.subr.mxu0 0.0
    %1283 = vmatpush1.msra.mxu0 0.0
    %1284 = vmatprep.subr.mxu0 0.0
    %1285 = vmatpush1.msra.mxu0 0.0
    %1286 = vmatprep.subr.mxu0 0.0
    %1287 = vmatpush1.msra.mxu0 0.0
    %1288 = vmatprep.subr.mxu0 0.0
    %1289 = vmatpush1.msra.mxu0 0.0
    %1290 = vmatprep.subr.mxu0 0.0
    %1291 = vmatpush1.msra.mxu0 0.0
    %1292 = vmatprep.subr.mxu0 0.0
    %1293 = vmatpush1.msra.mxu0 0.0
    %1294 = vmatprep.subr.mxu0 0.0
    %1295 = vmatpush1.msra.mxu0 0.0
    %1296 = vmatprep.subr.mxu0 0.0
    %1297 = vmatpush1.msra.mxu0 0.0
    %1298 = vmatprep.subr.mxu0 0.0
    %1299 = vmatpush1.msra.mxu0 0.0
    %1300 = vmatprep.subr.mxu0 0.0
    %1301 = vmatpush1.msra.mxu0 0.0
    %1302 = vmatprep.subr.mxu0 0.0
    %1303 = vmatpush1.msra.mxu0 0.0
    %1304 = vmatprep.subr.mxu0 0.0
    %1305 = vmatpush1.msra.mxu0 0.0
    %1306 = vmatprep.subr.mxu0 0.0
    %1307 = vmatpush1.msra.mxu0 0.0
    %1308 = vmatprep.subr.mxu0 0.0
    %1309 = vmatpush1.msra.mxu0 0.0
    %1310 = vmatprep.subr.mxu0 0.0
    %1311 = vmatpush1.msra.mxu0 0.0
    %1312 = vmatprep.subr.mxu0 0.0
    %1313 = vmatpush1.msra.mxu0 0.0
    %1314 = vmatprep.subr.mxu0 0.0
    %1315 = vmatpush1.msra.mxu0 0.0
    %1316 = vmatprep.subr.mxu0 0.0
    %1317 = vmatpush1.msra.mxu0 0.0
    %1318 = vmatprep.subr.mxu0 0.0
    %1319 = vmatpush1.msra.mxu0 0.0
    %1320 = vmatprep.subr.mxu0 0.0
    %1321 = vmatpush1.msra.mxu0 0.0
    %1322 = vmatprep.subr.mxu0 0.0
    %1323 = vmatpush1.msra.mxu0 0.0
    %1324 = vmatprep.subr.mxu0 0.0
    %1325 = vmatpush1.msra.mxu0 0.0
    %1326 = vmatprep.subr.mxu0 0.0
    %1327 = vmatpush1.msra.mxu0 0.0
    %1328 = vmatprep.subr.mxu0 0.0
    %1329 = vmatpush1.msra.mxu0 0.0
    %1330 = vmatprep.subr.mxu0 0.0
    %1331 = vmatpush1.msra.mxu0 0.0
    %1332 = vmatprep.subr.mxu0 0.0
    %1333 = vmatpush1.msra.mxu0 0.0
    %1334 = vmatprep.subr.mxu0 0.0
    %1335 = vmatpush1.msra.mxu0 0.0
    %1336 = vmatprep.mubr.f32.mxu0 0.0
    %1337 = vmatmul.mubr.f32.gmra.mrb[0].mxu0 %v1267
    %v1338 = vpop.f32.mrb[0].mxu0
    %v1339 = vadd.f32 0.0, %v1338
    %v1340 = vpop.f32.mrb[0].mxu0
    %1341 = vmatprep.mubr.f32.mxu0 0.0
    %1342 = vmatmul.mubr.f32.gmra.mrb[0].mxu0 %v1270
    %v1343 = vpop.f32.mrb[0].mxu0
    %v1344 = vadd.f32 0.0, %v1343
    %v1345 = vpop.f32.mrb[0].mxu0
    %1346 = vdwg.mxu0
    %v1347 = vadd.f32 %v42, %v1339
    %v1348 = vadd.f32 %v43, %v1344
    %v1349 = vmul.f32 %v1347, %v1347
    %v1350 = vmul.f32 %v1348, %v1348
    %v1351 = vsel %vm46, %v1349, 0.0
    %1352 = vadd.xlane.f32.xlu0 %v1351
    %v1353 = vpop.xlane.xlu0 %1352
    %v1354 = vsel %vm46, %v1350, 0.0
    %1355 = vadd.xlane.f32.xlu0 %v1354
    %v1356 = vpop.xlane.xlu0 %1355
    %v1357 = vmul.f32 %v1353, %v53
    %v1358 = vmul.f32 %v1356, %v53
    %v1359 = vadd.f32 %v1357, 1e-05
    %v1360 = vadd.f32 %v1358, 1e-05
    %v1361 = vrsqrt.pop %v1359
    %v1362 = vrsqrt.pop %v1360
    %v1363 = vmul.f32 %v1347, %v1361
    %v1364 = vmul.f32 %v1348, %v1362
    %v1365 = vld [vmem:[%s7] sm:$0xff]
    %v1366 = vld [vmem:[%s7 + $0x8] sm:$0xff]
    %v1367 = vld [vmem:[%s7 + $0x10] sm:$0xff]
    %v1368 = vld [vmem:[%s7 + $0x18] sm:$0xff]
    %v1370 = vsel %vm46, %v1363, 0
    %v1373 = vsel %vm46, %v1364, 0
    %1375 = vmatprep.subr.mxu0 0.0
    %1376 = vmatpush1.msra.mxu0 %v1365
    %1377 = vmatprep.subr.mxu0 0.0
    %1378 = vmatpush1.msra.mxu0 %v1366
    %1379 = vmatprep.subr.mxu0 0.0
    %1380 = vmatpush1.msra.mxu0 %v1367
    %1381 = vmatprep.subr.mxu0 0.0
    %1382 = vmatpush1.msra.mxu0 %v1368
    %1383 = vmatprep.subr.mxu0 0.0
    %1384 = vmatpush1.msra.mxu0 0.0
    %1385 = vmatprep.subr.mxu0 0.0
    %1386 = vmatpush1.msra.mxu0 0.0
    %1387 = vmatprep.subr.mxu0 0.0
    %1388 = vmatpush1.msra.mxu0 0.0
    %1389 = vmatprep.subr.mxu0 0.0
    %1390 = vmatpush1.msra.mxu0 0.0
    %1391 = vmatprep.subr.mxu0 0.0
    %1392 = vmatpush1.msra.mxu0 0.0
    %1393 = vmatprep.subr.mxu0 0.0
    %1394 = vmatpush1.msra.mxu0 0.0
    %1395 = vmatprep.subr.mxu0 0.0
    %1396 = vmatpush1.msra.mxu0 0.0
    %1397 = vmatprep.subr.mxu0 0.0
    %1398 = vmatpush1.msra.mxu0 0.0
    %1399 = vmatprep.subr.mxu0 0.0
    %1400 = vmatpush1.msra.mxu0 0.0
    %1401 = vmatprep.subr.mxu0 0.0
    %1402 = vmatpush1.msra.mxu0 0.0
    %1403 = vmatprep.subr.mxu0 0.0
    %1404 = vmatpush1.msra.mxu0 0.0
    %1405 = vmatprep.subr.mxu0 0.0
    %1406 = vmatpush1.msra.mxu0 0.0
    %1407 = vmatprep.subr.mxu0 0.0
    %1408 = vmatpush1.msra.mxu0 0.0
    %1409 = vmatprep.subr.mxu0 0.0
    %1410 = vmatpush1.msra.mxu0 0.0
    %1411 = vmatprep.subr.mxu0 0.0
    %1412 = vmatpush1.msra.mxu0 0.0
    %1413 = vmatprep.subr.mxu0 0.0
    %1414 = vmatpush1.msra.mxu0 0.0
    %1415 = vmatprep.subr.mxu0 0.0
    %1416 = vmatpush1.msra.mxu0 0.0
    %1417 = vmatprep.subr.mxu0 0.0
    %1418 = vmatpush1.msra.mxu0 0.0
    %1419 = vmatprep.subr.mxu0 0.0
    %1420 = vmatpush1.msra.mxu0 0.0
    %1421 = vmatprep.subr.mxu0 0.0
    %1422 = vmatpush1.msra.mxu0 0.0
    %1423 = vmatprep.subr.mxu0 0.0
    %1424 = vmatpush1.msra.mxu0 0.0
    %1425 = vmatprep.subr.mxu0 0.0
    %1426 = vmatpush1.msra.mxu0 0.0
    %1427 = vmatprep.subr.mxu0 0.0
    %1428 = vmatpush1.msra.mxu0 0.0
    %1429 = vmatprep.subr.mxu0 0.0
    %1430 = vmatpush1.msra.mxu0 0.0
    %1431 = vmatprep.subr.mxu0 0.0
    %1432 = vmatpush1.msra.mxu0 0.0
    %1433 = vmatprep.subr.mxu0 0.0
    %1434 = vmatpush1.msra.mxu0 0.0
    %1435 = vmatprep.subr.mxu0 0.0
    %1436 = vmatpush1.msra.mxu0 0.0
    %1437 = vmatprep.subr.mxu0 0.0
    %1438 = vmatpush1.msra.mxu0 0.0
    %1439 = vmatprep.mubr.f32.mxu0 0.0
    %1440 = vmatmul.mubr.f32.gmra.mrb[0].mxu0 %v1370
    %v1441 = vpop.f32.mrb[0].mxu0
    %v1442 = vadd.f32 0.0, %v1441
    %v1443 = vpop.f32.mrb[0].mxu0
    %1444 = vmatprep.mubr.f32.mxu0 0.0
    %1445 = vmatmul.mubr.f32.gmra.mrb[0].mxu0 %v1373
    %v1446 = vpop.f32.mrb[0].mxu0
    %v1447 = vadd.f32 0.0, %v1446
    %v1448 = vpop.f32.mrb[0].mxu0
    %1449 = vdwg.mxu0
    %v1450 = vmul.f32 %v1442, 0.5
    %v1451 = vmul.f32 %v1447, 0.5
    %v1452 = vmul.f32 %v1442, 0.70710677
    %v1453 = vmul.f32 %v1447, 0.70710677
    %vm1454 = vcmp.lt.f32.partialorder %v1452, 0.0
    %vm1455 = vcmp.lt.f32.partialorder %v1453, 0.0
    %v1456 = vsel %vm1454, -1.0, 1.0
    %v1457 = vsel %vm1455, -1.0, 1.0
    %v1458 = vand.u32 2147483647, %v1452
    %v1459 = vand.u32 2147483647, %v1453
    %v1460 = vmul.f32 %v1458, 0.3275911
    %v1461 = vmul.f32 %v1459, 0.3275911
    %v1462 = vadd.f32 %v1460, 1.0
    %v1463 = vadd.f32 %v1461, 1.0
    %v1464 = vrcp.pop %v1462
    %v1465 = vmul.f32 1.0, %v1464
    %v1466 = vrcp.pop %v1463
    %v1467 = vmul.f32 1.0, %v1466
    %v1468 = vmul.f32 %v1465, 1.0614054
    %v1469 = vmul.f32 %v1467, 1.0614054
    %v1470 = vadd.f32 %v1468, -1.4531521
    %v1471 = vadd.f32 %v1469, -1.4531521
    %v1472 = vmul.f32 %v1470, %v1465
    %v1473 = vmul.f32 %v1471, %v1467
    %v1474 = vadd.f32 %v1472, 1.4214138
    %v1475 = vadd.f32 %v1473, 1.4214138
    %v1476 = vmul.f32 %v1474, %v1465
    %v1477 = vmul.f32 %v1475, %v1467
    %v1478 = vadd.f32 %v1476, -0.28449672
    %v1479 = vadd.f32 %v1477, -0.28449672
    %v1480 = vmul.f32 %v1478, %v1465
    %v1481 = vmul.f32 %v1479, %v1467
    %v1482 = vadd.f32 %v1480, 0.2548296
    %v1483 = vadd.f32 %v1481, 0.2548296
    %v1484 = vmul.f32 %v1482, %v1465
    %v1485 = vmul.f32 %v1483, %v1467
    %v1486 = vsub.f32 0.0, %v1458
    %v1487 = vsub.f32 0.0, %v1459
    %v1488 = vmul.f32 %v1486, %v1458
    %v1489 = vmul.f32 %v1487, %v1459
    %v1490 = vmul.f32 %v1488, 1.442695
    %v1491 = vpow.pop %v1490
    %v1492 = vmul.f32 %v1489, 1.442695
    %v1493 = vpow.pop %v1492
    %v1494 = vmul.f32 %v1484, %v1491
    %v1495 = vmul.f32 %v1485, %v1493
    %v1496 = vsub.f32 1.0, %v1494
    %v1497 = vsub.f32 1.0, %v1495
    %v1498 = vmul.f32 %v1456, %v1496
    %v1499 = vmul.f32 %v1457, %v1497
    %v1500 = vadd.f32 %v1498, 1.0
    %v1501 = vadd.f32 %v1499, 1.0
    %v1502 = vmul.f32 %v1450, %v1500
    %v1503 = vmul.f32 %v1451, %v1501
    %v1504 = vld [vmem:[%s8] sm:$0xff]
    %v1505 = vld [vmem:[%s8 + $0x8] sm:$0xff]
    %v1506 = vld [vmem:[%s8 + $0x10] sm:$0xff]
    %v1507 = vld [vmem:[%s8 + $0x18] sm:$0xff]
    %v1508 = vld [vmem:[%s8 + $0x20] sm:$0xff]
    %v1509 = vld [vmem:[%s8 + $0x28] sm:$0xff]
    %v1510 = vld [vmem:[%s8 + $0x30] sm:$0xff]
    %v1511 = vld [vmem:[%s8 + $0x38] sm:$0xff]
    %v1512 = vld [vmem:[%s8 + $0x40] sm:$0xff]
    %v1513 = vld [vmem:[%s8 + $0x48] sm:$0xff]
    %v1514 = vld [vmem:[%s8 + $0x50] sm:$0xff]
    %v1515 = vld [vmem:[%s8 + $0x58] sm:$0xff]
    %v1516 = vld [vmem:[%s8 + $0x60] sm:$0xff]
    %v1517 = vld [vmem:[%s8 + $0x68] sm:$0xff]
    %v1518 = vld [vmem:[%s8 + $0x70] sm:$0xff]
    %v1519 = vld [vmem:[%s8 + $0x78] sm:$0xff]
    %1520 = vmatprep.subr.mxu0 0.0
    %1521 = vmatpush1.msra.mxu0 %v1504
    %1522 = vmatprep.subr.mxu0 0.0
    %1523 = vmatpush1.msra.mxu0 %v1505
    %1524 = vmatprep.subr.mxu0 0.0
    %1525 = vmatpush1.msra.mxu0 %v1506
    %1526 = vmatprep.subr.mxu0 0.0
    %1527 = vmatpush1.msra.mxu0 %v1507
    %1528 = vmatprep.subr.mxu0 0.0
    %1529 = vmatpush1.msra.mxu0 %v1508
    %1530 = vmatprep.subr.mxu0 0.0
    %1531 = vmatpush1.msra.mxu0 %v1509
    %1532 = vmatprep.subr.mxu0 0.0
    %1533 = vmatpush1.msra.mxu0 %v1510
    %1534 = vmatprep.subr.mxu0 0.0
    %1535 = vmatpush1.msra.mxu0 %v1511
    %1536 = vmatprep.subr.mxu0 0.0
    %1537 = vmatpush1.msra.mxu0 %v1512
    %1538 = vmatprep.subr.mxu0 0.0
    %1539 = vmatpush1.msra.mxu0 %v1513
    %1540 = vmatprep.subr.mxu0 0.0
    %1541 = vmatpush1.msra.mxu0 %v1514
    %1542 = vmatprep.subr.mxu0 0.0
    %1543 = vmatpush1.msra.mxu0 %v1515
    %1544 = vmatprep.subr.mxu0 0.0
    %1545 = vmatpush1.msra.mxu0 %v1516
    %1546 = vmatprep.subr.mxu0 0.0
    %1547 = vmatpush1.msra.mxu0 %v1517
    %1548 = vmatprep.subr.mxu0 0.0
    %1549 = vmatpush1.msra.mxu0 %v1518
    %1550 = vmatprep.subr.mxu0 0.0
    %1551 = vmatpush1.msra.mxu0 %v1519
    %1552 = vmatprep.subr.mxu0 0.0
    %1553 = vmatpush1.msra.mxu0 0.0
    %1554 = vmatprep.subr.mxu0 0.0
    %1555 = vmatpush1.msra.mxu0 0.0
    %1556 = vmatprep.subr.mxu0 0.0
    %1557 = vmatpush1.msra.mxu0 0.0
    %1558 = vmatprep.subr.mxu0 0.0
    %1559 = vmatpush1.msra.mxu0 0.0
    %1560 = vmatprep.subr.mxu0 0.0
    %1561 = vmatpush1.msra.mxu0 0.0
    %1562 = vmatprep.subr.mxu0 0.0
    %1563 = vmatpush1.msra.mxu0 0.0
    %1564 = vmatprep.subr.mxu0 0.0
    %1565 = vmatpush1.msra.mxu0 0.0
    %1566 = vmatprep.subr.mxu0 0.0
    %1567 = vmatpush1.msra.mxu0 0.0
    %1568 = vmatprep.subr.mxu0 0.0
    %1569 = vmatpush1.msra.mxu0 0.0
    %1570 = vmatprep.subr.mxu0 0.0
    %1571 = vmatpush1.msra.mxu0 0.0
    %1572 = vmatprep.subr.mxu0 0.0
    %1573 = vmatpush1.msra.mxu0 0.0
    %1574 = vmatprep.subr.mxu0 0.0
    %1575 = vmatpush1.msra.mxu0 0.0
    %1576 = vmatprep.subr.mxu0 0.0
    %1577 = vmatpush1.msra.mxu0 0.0
    %1578 = vmatprep.subr.mxu0 0.0
    %1579 = vmatpush1.msra.mxu0 0.0
    %1580 = vmatprep.subr.mxu0 0.0
    %1581 = vmatpush1.msra.mxu0 0.0
    %1582 = vmatprep.subr.mxu0 0.0
    %1583 = vmatpush1.msra.mxu0 0.0
    %1584 = vmatprep.mubr.f32.mxu0 0.0
    %1585 = vmatmul.mubr.f32.gmra.mrb[0].mxu0 %v1502
    %v1586 = vpop.f32.mrb[0].mxu0
    %v1587 = vadd.f32 0.0, %v1586
    %v1588 = vpop.f32.mrb[0].mxu0
    %1589 = vmatprep.mubr.f32.mxu0 0.0
    %1590 = vmatmul.mubr.f32.gmra.mrb[0].mxu0 %v1503
    %v1591 = vpop.f32.mrb[0].mxu0
    %v1592 = vadd.f32 0.0, %v1591
    %v1593 = vpop.f32.mrb[0].mxu0
    %1594 = vdwg.mxu0
    %v1595 = vadd.f32 %v1347, %v1587
    %v1596 = vadd.f32 %v1348, %v1592
    %1597 = vst.msk [vmem:[#allocation2] sm:$0xff] %vm46, %v1595
    %1598 = vst.msk [vmem:[#allocation2 + $0x8] sm:$0xff] %vm46, %v1596
    // Predicated region
    $region50: #{block_forward.1} parent=1 // pred_check
      _
    $region51: #{block_forward.1} parent=1 // pred_check_branch
      %1600 = sbr.rel (0) target = $region53
    $region52: #{block_forward.1} parent=1 // pred_region
      %s1602 = ssub.s32 256, 256
      %1603 = vsyncadd [#allocation3], %s1602
      %s1604 = sshll.u32 [#allocation2], 4
      %s1605 = int_to_ptr.vmem [resolvable:$true] %s1604
      %1610 = dma.vmem_to_hbm [thread:$0]  %s1605, 256, %s12, [#allocation3], 128, 128, 8
    $region53: #{block_forward.1} parent=1 // pred_fallthru
      _
    // Predicated region
    $region54: #{block_forward.1} parent=1 // pred_check
      _
    $region55: #{block_forward.1} parent=1 // pred_check_branch
      %1612 = sbr.rel (0) target = $region57
    $region56: #{block_forward.1} parent=1 // pred_region
      %1613 = dma.done [#allocation3], 256
    $region57: #{block_forward.1} parent=1 // pred_fallthru
      _
    %1614 = vsyncpa [#allocation3], 1

</llo_original>
